<compile_context>
chip_gen: v7x
topology: tpu7x:2x2x1
jax: 0.10.0
libtpu: 0.0.40
codegen_flags: <defaults>
</compile_context>

<pallas_src>
import functools

import jax
import jax.numpy as jnp
from jax.experimental import pallas as pl
from jax.experimental.pallas import tpu as pltpu

LANE = 128      # vreg lane width (fast axis)
SUBLANE = 8     # f32 vreg sublane count (slow axis)


def _round_up(n, m):
    return ((n + m - 1) // m) * m


def _lstm_kernel(x_ref, wih_ref, whh_ref, b_ref, wfc_ref, bfc_ref, out_ref, *,
                 seq_len, batch, batch_pad, hidden, gate_stride, use_bf16_matmul):
    mm_dtype = jnp.bfloat16 if use_bf16_matmul else jnp.float32

    # ---- Phase 1: input projection of ALL timesteps in ONE MXU call (off the serial
    # chain). Rows [t*batch_pad, t*batch_pad + batch) belong to step t; batch_pad is a
    # multiple of 8 so each per-step row slice below is sublane-tile-aligned.
    xp = jnp.dot(x_ref[...].astype(mm_dtype), wih_ref[...].astype(mm_dtype),
                 preferred_element_type=jnp.float32) + b_ref[...]       # (T*BP, 4*GS)

    whh = whh_ref[...].astype(mm_dtype)      # (H, 4*GS): only H weight rows per serial step

    h = jnp.zeros((batch, hidden), jnp.float32)
    c = jnp.zeros((batch, hidden), jnp.float32)

    # ---- Phase 2: serial recurrence; only h_prev @ W_hh^T is on the chain per step.
    # Statically unrolled (tiny T). All slices are tile-aligned: row offsets are
    # multiples of 8, lane offsets multiples of 128.
    # TODO(synk): for large seq_len use lax.fori_loop instead of Python unrolling.
    for t in range(seq_len):
        r0 = t * batch_pad
        gates = xp[r0:r0 + batch, :] + jnp.dot(
            h.astype(mm_dtype), whh, preferred_element_type=jnp.float32)  # (B, 4*GS)
        # PyTorch gate order [i, f, g, o]; gate k lives at lanes [k*GS, k*GS + H).
        i_g = jax.nn.sigmoid(gates[:, 0 * gate_stride:0 * gate_stride + hidden])
        f_g = jax.nn.sigmoid(gates[:, 1 * gate_stride:1 * gate_stride + hidden])
        g_g = jnp.tanh(gates[:, 2 * gate_stride:2 * gate_stride + hidden])
        o_g = jax.nn.sigmoid(gates[:, 3 * gate_stride:3 * gate_stride + hidden])
        c = f_g * c + i_g * g_g
        h = o_g * jnp.tanh(c)

    # ---- Phase 3: fc + LeakyReLU epilogue; lane-dense (B, OUTP) store.
    y = jnp.dot(h.astype(mm_dtype), wfc_ref[...].astype(mm_dtype),
                preferred_element_type=jnp.float32) + bfc_ref[...]
    out_ref[...] = jnp.where(y > 0.0, y, 0.01 * y).astype(out_ref.dtype)


def lstm_forward(x, w_ih, w_hh, b_ih, b_hh, w_fc, b_fc, *, use_bf16_matmul=False):
    """x: (B, T, in_dim) batch_first (PyTorch layout). Returns (B, 1, 9)."""
    B, T, in_dim = x.shape
    H = w_hh.shape[1]
    out_dim = w_fc.shape[0]

    GS = LANE                        # per-gate lane stride (tile-aligned gate blocks)
    BP = _round_up(B, SUBLANE)       # per-timestep row stride in the flattened slab
    OUTP = _round_up(out_dim, LANE)  # lane-dense fc output width

    # Flattened time-major input slab: rows [t*BP, t*BP + B) hold x[:, t, :].
    x_tm = jnp.transpose(x, (1, 0, 2)).astype(jnp.float32)                 # (T, B, in_dim)
    x_slab = jnp.zeros((T, BP, in_dim), jnp.float32).at[:, :B, :].set(x_tm)
    x_slab = x_slab.reshape(T * BP, in_dim)

    # Place gate k's columns at lane offset k*GS (torch order [i, f, g, o]); the padded
    # lanes of each 128-lane gate block are never read by the kernel.
    def place_gates(w_t):            # (K, 4H) -> (K, 4*GS)
        K = w_t.shape[0]
        out = jnp.zeros((K, 4 * GS), jnp.float32)
        for k in range(4):
            out = out.at[:, k * GS:k * GS + H].set(w_t[:, k * H:(k + 1) * H])
        return out

    wih_p = place_gates(w_ih.T.astype(jnp.float32))                        # (in_dim, 4*GS)
    whh_p = place_gates(w_hh.T.astype(jnp.float32))                        # (H, 4*GS)
    b_p = place_gates((b_ih + b_hh).astype(jnp.float32).reshape(1, 4 * H))  # (1, 4*GS)
    wfc_p = jnp.zeros((H, OUTP), jnp.float32).at[:, :out_dim].set(
        w_fc.T.astype(jnp.float32))                                        # (H, OUTP)
    bfc_p = jnp.zeros((1, OUTP), jnp.float32).at[:, :out_dim].set(
        b_fc.astype(jnp.float32))                                          # (1, OUTP)

    kernel = functools.partial(
        _lstm_kernel, seq_len=T, batch=B, batch_pad=BP, hidden=H,
        gate_stride=GS, use_bf16_matmul=use_bf16_matmul)

    out = pl.pallas_call(
        kernel,
        out_shape=jax.ShapeDtypeStruct((B, OUTP), jnp.float32),
        grid_spec=pltpu.PrefetchScalarGridSpec(
            num_scalar_prefetch=0,
            grid=(1,),
            in_specs=[
                pl.BlockSpec((T * BP, in_dim), lambda i: (0, 0)),   # x slab
                pl.BlockSpec((in_dim, 4 * GS), lambda i: (0, 0)),   # W_ih^T (gate-placed)
                pl.BlockSpec((H, 4 * GS), lambda i: (0, 0)),        # W_hh^T (gate-placed, H rows)
                pl.BlockSpec((1, 4 * GS), lambda i: (0, 0)),        # fused bias (gate-placed)
                pl.BlockSpec((H, OUTP), lambda i: (0, 0)),          # W_fc^T (lane-padded)
                pl.BlockSpec((1, OUTP), lambda i: (0, 0)),          # b_fc (lane-padded)
            ],
            out_specs=pl.BlockSpec((B, OUTP), lambda i: (0, 0)),
        ),
        compiler_params=pltpu.CompilerParams(
            dimension_semantics=("arbitrary",)),
    )(x_slab, wih_p, whh_p, b_p, wfc_p, bfc_p)

    # Matches the module's x.reshape(-1, 1, 9) (out_dim == 9).
    return out[:, :out_dim].astype(x.dtype).reshape(-1, 1, 9)


def lstm_reference(x, w_ih, w_hh, b_ih, b_hh, w_fc, b_fc):
    """Pure-JAX reference reproducing torch.nn.LSTM + Linear + LeakyReLU."""
    B, T, _ = x.shape
    H = w_hh.shape[1]
    h = jnp.zeros((B, H), jnp.float32)
    c = jnp.zeros((B, H), jnp.float32)
    for t in range(T):
        gates = x[:, t, :] @ w_ih.T + h @ w_hh.T + b_ih + b_hh
        i_g = jax.nn.sigmoid(gates[:, 0 * H:1 * H])
        f_g = jax.nn.sigmoid(gates[:, 1 * H:2 * H])
        g_g = jnp.tanh(gates[:, 2 * H:3 * H])
        o_g = jax.nn.sigmoid(gates[:, 3 * H:4 * H])
        c = f_g * c + i_g * g_g
        h = o_g * jnp.tanh(c)
    y = h @ w_fc.T + b_fc
    y = jnp.where(y > 0, y, 0.01 * y)
    return y.reshape(-1, 1, 9)


if __name__ == "__main__":
    # Small shapes consistent with the module: out_dim must be 9 for reshape(-1,1,9).
    B, T, IN_DIM, H, OUT_DIM = 2, 8, 4, 32, 9

    key = jax.random.PRNGKey(0)
    ks = jax.random.split(key, 7)
    k_init = 1.0 / jnp.sqrt(jnp.float32(H))

    x = jax.random.normal(ks[0], (B, T, IN_DIM), jnp.float32)
    w_ih = jax.random.uniform(ks[1], (4 * H, IN_DIM), jnp.float32, -k_init, k_init)
    w_hh = jax.random.uniform(ks[2], (4 * H, H), jnp.float32, -k_init, k_init)
    b_ih = jax.random.uniform(ks[3], (4 * H,), jnp.float32, -k_init, k_init)
    b_hh = jax.random.uniform(ks[4], (4 * H,), jnp.float32, -k_init, k_init)
    w_fc = jax.random.uniform(ks[5], (OUT_DIM, H), jnp.float32, -k_init, k_init)
    b_fc = jax.random.uniform(ks[6], (OUT_DIM,), jnp.float32, -k_init, k_init)

    ref = lstm_reference(x, w_ih, w_hh, b_ih, b_hh, w_fc, b_fc)

    # Default (exact) path: f32 matmul operands.
    out = jax.block_until_ready(lstm_forward(x, w_ih, w_hh, b_ih, b_hh, w_fc, b_fc))
    assert out.shape == (B, 1, 9), out.shape
    assert jnp.allclose(out, ref, atol=1e-5, rtol=1e-5), "f32 path mismatch vs reference"

    # Fast path: bf16 MXU operands (state / nonlinearities stay f32); relaxed sanity check.
    out_bf16 = jax.block_until_ready(
        lstm_forward(x, w_ih, w_hh, b_ih, b_hh, w_fc, b_fc, use_bf16_matmul=True))
    assert out_bf16.shape == (B, 1, 9), out_bf16.shape
    assert jnp.allclose(out_bf16, ref, atol=1.5e-1, rtol=0.0), "bf16 path mismatch vs reference"

    print("KERNEL_OK")
</pallas_src>

<mosaic_0001>
module attributes {stable_mosaic.version = 11 : i64} {
  func.func @_lstm_kernel(%arg0: i32, %arg1: memref<64x4xf32, #tpu.memory_space<vmem>>, %arg2: memref<4x512xf32, #tpu.memory_space<vmem>>, %arg3: memref<32x512xf32, #tpu.memory_space<vmem>>, %arg4: memref<1x512xf32, #tpu.memory_space<vmem>>, %arg5: memref<32x128xf32, #tpu.memory_space<vmem>>, %arg6: memref<1x128xf32, #tpu.memory_space<vmem>>, %arg7: memref<2x128xf32, #tpu.memory_space<vmem>>) attributes {dimension_semantics = [#tpu.dimension_semantics<arbitrary>], iteration_bounds = array<i64: 1>, scalar_prefetch = 0 : i64, scratch_operands = 0 : i64, tpu.core_type = #tpu.core_type<tc>, window_params = [{pipeline_mode = #tpu.pipeline_mode<synchronous>, transform_indices = @transform_0, window_bounds = array<i64: 64, 4>}, {pipeline_mode = #tpu.pipeline_mode<synchronous>, transform_indices = @transform_1, window_bounds = array<i64: 4, 512>}, {pipeline_mode = #tpu.pipeline_mode<synchronous>, transform_indices = @transform_2, window_bounds = array<i64: 32, 512>}, {pipeline_mode = #tpu.pipeline_mode<synchronous>, transform_indices = @transform_3, window_bounds = array<i64: 1, 512>}, {pipeline_mode = #tpu.pipeline_mode<synchronous>, transform_indices = @transform_4, window_bounds = array<i64: 32, 128>}, {pipeline_mode = #tpu.pipeline_mode<synchronous>, transform_indices = @transform_5, window_bounds = array<i64: 1, 128>}, {pipeline_mode = #tpu.pipeline_mode<synchronous>, transform_indices = @transform_6, window_bounds = array<i64: 2, 128>}]} {
    %c0 = arith.constant 0 : index
    %c0_0 = arith.constant 0 : index
    %0 = vector.load %arg1[%c0, %c0_0] : memref<64x4xf32, #tpu.memory_space<vmem>>, vector<64x4xf32>
    %c0_1 = arith.constant 0 : index
    %c0_2 = arith.constant 0 : index
    %1 = vector.load %arg2[%c0_1, %c0_2] : memref<4x512xf32, #tpu.memory_space<vmem>>, vector<4x512xf32>
    %cst = arith.constant dense<0.000000e+00> : vector<64x512xf32>
    %2 = tpu.matmul %0, %1, %cst {dimension_numbers = #tpu.dot_dimension_numbers<[1], [0], [0], [1], [0, 0, 1, 1], [], []>} : vector<64x4xf32>, vector<4x512xf32>, vector<64x512xf32> -> vector<64x512xf32>
    %c0_3 = arith.constant 0 : index
    %c0_4 = arith.constant 0 : index
    %3 = vector.load %arg4[%c0_3, %c0_4] : memref<1x512xf32, #tpu.memory_space<vmem>>, vector<1x512xf32>
    %4 = vector.broadcast %3 : vector<1x512xf32> to vector<64x512xf32>
    %5 = arith.addf %2, %4 : vector<64x512xf32>
    %c0_5 = arith.constant 0 : index
    %c0_6 = arith.constant 0 : index
    %6 = vector.load %arg3[%c0_5, %c0_6] : memref<32x512xf32, #tpu.memory_space<vmem>>, vector<32x512xf32>
    %cst_7 = arith.constant 0.000000e+00 : f32
    %7 = vector.broadcast %cst_7 : f32 to vector<2x32xf32>
    %cst_8 = arith.constant 0.000000e+00 : f32
    %8 = vector.broadcast %cst_8 : f32 to vector<2x32xf32>
    %9 = vector.extract_strided_slice %5 {offsets = [0, 0], sizes = [2, 512], strides = [1, 1]} : vector<64x512xf32> to vector<2x512xf32>
    %cst_9 = arith.constant dense<0.000000e+00> : vector<2x512xf32>
    %10 = tpu.matmul %7, %6, %cst_9 {dimension_numbers = #tpu.dot_dimension_numbers<[1], [0], [0], [1], [0, 0, 1, 1], [], []>} : vector<2x32xf32>, vector<32x512xf32>, vector<2x512xf32> -> vector<2x512xf32>
    %11 = arith.addf %9, %10 : vector<2x512xf32>
    %12 = vector.extract_strided_slice %11 {offsets = [0, 0], sizes = [2, 32], strides = [1, 1]} : vector<2x512xf32> to vector<2x32xf32>
    %13 = arith.negf %12 : vector<2x32xf32>
    %14 = math.exp %13 : vector<2x32xf32>
    %cst_10 = arith.constant 1.000000e+00 : f32
    %15 = vector.broadcast %cst_10 : f32 to vector<2x32xf32>
    %16 = arith.addf %15, %14 : vector<2x32xf32>
    %17 = arith.divf %15, %16 : vector<2x32xf32>
    %18 = vector.extract_strided_slice %11 {offsets = [0, 128], sizes = [2, 32], strides = [1, 1]} : vector<2x512xf32> to vector<2x32xf32>
    %19 = arith.negf %18 : vector<2x32xf32>
    %20 = math.exp %19 : vector<2x32xf32>
    %cst_11 = arith.constant 1.000000e+00 : f32
    %21 = vector.broadcast %cst_11 : f32 to vector<2x32xf32>
    %22 = arith.addf %21, %20 : vector<2x32xf32>
    %23 = arith.divf %21, %22 : vector<2x32xf32>
    %24 = vector.extract_strided_slice %11 {offsets = [0, 256], sizes = [2, 32], strides = [1, 1]} : vector<2x512xf32> to vector<2x32xf32>
    %25 = math.tanh %24 : vector<2x32xf32>
    %26 = vector.extract_strided_slice %11 {offsets = [0, 384], sizes = [2, 32], strides = [1, 1]} : vector<2x512xf32> to vector<2x32xf32>
    %27 = arith.negf %26 : vector<2x32xf32>
    %28 = math.exp %27 : vector<2x32xf32>
    %cst_12 = arith.constant 1.000000e+00 : f32
    %29 = vector.broadcast %cst_12 : f32 to vector<2x32xf32>
    %30 = arith.addf %29, %28 : vector<2x32xf32>
    %31 = arith.divf %29, %30 : vector<2x32xf32>
    %32 = arith.mulf %23, %8 : vector<2x32xf32>
    %33 = arith.mulf %17, %25 : vector<2x32xf32>
    %34 = arith.addf %32, %33 : vector<2x32xf32>
    %35 = math.tanh %34 : vector<2x32xf32>
    %36 = arith.mulf %31, %35 : vector<2x32xf32>
    %37 = vector.extract_strided_slice %5 {offsets = [8, 0], sizes = [2, 512], strides = [1, 1]} : vector<64x512xf32> to vector<2x512xf32>
    %cst_13 = arith.constant dense<0.000000e+00> : vector<2x512xf32>
    %38 = tpu.matmul %36, %6, %cst_13 {dimension_numbers = #tpu.dot_dimension_numbers<[1], [0], [0], [1], [0, 0, 1, 1], [], []>} : vector<2x32xf32>, vector<32x512xf32>, vector<2x512xf32> -> vector<2x512xf32>
    %39 = arith.addf %37, %38 : vector<2x512xf32>
    %40 = vector.extract_strided_slice %39 {offsets = [0, 0], sizes = [2, 32], strides = [1, 1]} : vector<2x512xf32> to vector<2x32xf32>
    %41 = arith.negf %40 : vector<2x32xf32>
    %42 = math.exp %41 : vector<2x32xf32>
    %cst_14 = arith.constant 1.000000e+00 : f32
    %43 = vector.broadcast %cst_14 : f32 to vector<2x32xf32>
    %44 = arith.addf %43, %42 : vector<2x32xf32>
    %45 = arith.divf %43, %44 : vector<2x32xf32>
    %46 = vector.extract_strided_slice %39 {offsets = [0, 128], sizes = [2, 32], strides = [1, 1]} : vector<2x512xf32> to vector<2x32xf32>
    %47 = arith.negf %46 : vector<2x32xf32>
    %48 = math.exp %47 : vector<2x32xf32>
    %cst_15 = arith.constant 1.000000e+00 : f32
    %49 = vector.broadcast %cst_15 : f32 to vector<2x32xf32>
    %50 = arith.addf %49, %48 : vector<2x32xf32>
    %51 = arith.divf %49, %50 : vector<2x32xf32>
    %52 = vector.extract_strided_slice %39 {offsets = [0, 256], sizes = [2, 32], strides = [1, 1]} : vector<2x512xf32> to vector<2x32xf32>
    %53 = math.tanh %52 : vector<2x32xf32>
    %54 = vector.extract_strided_slice %39 {offsets = [0, 384], sizes = [2, 32], strides = [1, 1]} : vector<2x512xf32> to vector<2x32xf32>
    %55 = arith.negf %54 : vector<2x32xf32>
    %56 = math.exp %55 : vector<2x32xf32>
    %cst_16 = arith.constant 1.000000e+00 : f32
    %57 = vector.broadcast %cst_16 : f32 to vector<2x32xf32>
    %58 = arith.addf %57, %56 : vector<2x32xf32>
    %59 = arith.divf %57, %58 : vector<2x32xf32>
    %60 = arith.mulf %51, %34 : vector<2x32xf32>
    %61 = arith.mulf %45, %53 : vector<2x32xf32>
    %62 = arith.addf %60, %61 : vector<2x32xf32>
    %63 = math.tanh %62 : vector<2x32xf32>
    %64 = arith.mulf %59, %63 : vector<2x32xf32>
    %65 = vector.extract_strided_slice %5 {offsets = [16, 0], sizes = [2, 512], strides = [1, 1]} : vector<64x512xf32> to vector<2x512xf32>
    %cst_17 = arith.constant dense<0.000000e+00> : vector<2x512xf32>
    %66 = tpu.matmul %64, %6, %cst_17 {dimension_numbers = #tpu.dot_dimension_numbers<[1], [0], [0], [1], [0, 0, 1, 1], [], []>} : vector<2x32xf32>, vector<32x512xf32>, vector<2x512xf32> -> vector<2x512xf32>
    %67 = arith.addf %65, %66 : vector<2x512xf32>
    %68 = vector.extract_strided_slice %67 {offsets = [0, 0], sizes = [2, 32], strides = [1, 1]} : vector<2x512xf32> to vector<2x32xf32>
    %69 = arith.negf %68 : vector<2x32xf32>
    %70 = math.exp %69 : vector<2x32xf32>
    %cst_18 = arith.constant 1.000000e+00 : f32
    %71 = vector.broadcast %cst_18 : f32 to vector<2x32xf32>
    %72 = arith.addf %71, %70 : vector<2x32xf32>
    %73 = arith.divf %71, %72 : vector<2x32xf32>
    %74 = vector.extract_strided_slice %67 {offsets = [0, 128], sizes = [2, 32], strides = [1, 1]} : vector<2x512xf32> to vector<2x32xf32>
    %75 = arith.negf %74 : vector<2x32xf32>
    %76 = math.exp %75 : vector<2x32xf32>
    %cst_19 = arith.constant 1.000000e+00 : f32
    %77 = vector.broadcast %cst_19 : f32 to vector<2x32xf32>
    %78 = arith.addf %77, %76 : vector<2x32xf32>
    %79 = arith.divf %77, %78 : vector<2x32xf32>
    %80 = vector.extract_strided_slice %67 {offsets = [0, 256], sizes = [2, 32], strides = [1, 1]} : vector<2x512xf32> to vector<2x32xf32>
    %81 = math.tanh %80 : vector<2x32xf32>
    %82 = vector.extract_strided_slice %67 {offsets = [0, 384], sizes = [2, 32], strides = [1, 1]} : vector<2x512xf32> to vector<2x32xf32>
    %83 = arith.negf %82 : vector<2x32xf32>
    %84 = math.exp %83 : vector<2x32xf32>
    %cst_20 = arith.constant 1.000000e+00 : f32
    %85 = vector.broadcast %cst_20 : f32 to vector<2x32xf32>
    %86 = arith.addf %85, %84 : vector<2x32xf32>
    %87 = arith.divf %85, %86 : vector<2x32xf32>
    %88 = arith.mulf %79, %62 : vector<2x32xf32>
    %89 = arith.mulf %73, %81 : vector<2x32xf32>
    %90 = arith.addf %88, %89 : vector<2x32xf32>
    %91 = math.tanh %90 : vector<2x32xf32>
    %92 = arith.mulf %87, %91 : vector<2x32xf32>
    %93 = vector.extract_strided_slice %5 {offsets = [24, 0], sizes = [2, 512], strides = [1, 1]} : vector<64x512xf32> to vector<2x512xf32>
    %cst_21 = arith.constant dense<0.000000e+00> : vector<2x512xf32>
    %94 = tpu.matmul %92, %6, %cst_21 {dimension_numbers = #tpu.dot_dimension_numbers<[1], [0], [0], [1], [0, 0, 1, 1], [], []>} : vector<2x32xf32>, vector<32x512xf32>, vector<2x512xf32> -> vector<2x512xf32>
    %95 = arith.addf %93, %94 : vector<2x512xf32>
    %96 = vector.extract_strided_slice %95 {offsets = [0, 0], sizes = [2, 32], strides = [1, 1]} : vector<2x512xf32> to vector<2x32xf32>
    %97 = arith.negf %96 : vector<2x32xf32>
    %98 = math.exp %97 : vector<2x32xf32>
    %cst_22 = arith.constant 1.000000e+00 : f32
    %99 = vector.broadcast %cst_22 : f32 to vector<2x32xf32>
    %100 = arith.addf %99, %98 : vector<2x32xf32>
    %101 = arith.divf %99, %100 : vector<2x32xf32>
    %102 = vector.extract_strided_slice %95 {offsets = [0, 128], sizes = [2, 32], strides = [1, 1]} : vector<2x512xf32> to vector<2x32xf32>
    %103 = arith.negf %102 : vector<2x32xf32>
    %104 = math.exp %103 : vector<2x32xf32>
    %cst_23 = arith.constant 1.000000e+00 : f32
    %105 = vector.broadcast %cst_23 : f32 to vector<2x32xf32>
    %106 = arith.addf %105, %104 : vector<2x32xf32>
    %107 = arith.divf %105, %106 : vector<2x32xf32>
    %108 = vector.extract_strided_slice %95 {offsets = [0, 256], sizes = [2, 32], strides = [1, 1]} : vector<2x512xf32> to vector<2x32xf32>
    %109 = math.tanh %108 : vector<2x32xf32>
    %110 = vector.extract_strided_slice %95 {offsets = [0, 384], sizes = [2, 32], strides = [1, 1]} : vector<2x512xf32> to vector<2x32xf32>
    %111 = arith.negf %110 : vector<2x32xf32>
    %112 = math.exp %111 : vector<2x32xf32>
    %cst_24 = arith.constant 1.000000e+00 : f32
    %113 = vector.broadcast %cst_24 : f32 to vector<2x32xf32>
    %114 = arith.addf %113, %112 : vector<2x32xf32>
    %115 = arith.divf %113, %114 : vector<2x32xf32>
    %116 = arith.mulf %107, %90 : vector<2x32xf32>
    %117 = arith.mulf %101, %109 : vector<2x32xf32>
    %118 = arith.addf %116, %117 : vector<2x32xf32>
    %119 = math.tanh %118 : vector<2x32xf32>
    %120 = arith.mulf %115, %119 : vector<2x32xf32>
    %121 = vector.extract_strided_slice %5 {offsets = [32, 0], sizes = [2, 512], strides = [1, 1]} : vector<64x512xf32> to vector<2x512xf32>
    %cst_25 = arith.constant dense<0.000000e+00> : vector<2x512xf32>
    %122 = tpu.matmul %120, %6, %cst_25 {dimension_numbers = #tpu.dot_dimension_numbers<[1], [0], [0], [1], [0, 0, 1, 1], [], []>} : vector<2x32xf32>, vector<32x512xf32>, vector<2x512xf32> -> vector<2x512xf32>
    %123 = arith.addf %121, %122 : vector<2x512xf32>
    %124 = vector.extract_strided_slice %123 {offsets = [0, 0], sizes = [2, 32], strides = [1, 1]} : vector<2x512xf32> to vector<2x32xf32>
    %125 = arith.negf %124 : vector<2x32xf32>
    %126 = math.exp %125 : vector<2x32xf32>
    %cst_26 = arith.constant 1.000000e+00 : f32
    %127 = vector.broadcast %cst_26 : f32 to vector<2x32xf32>
    %128 = arith.addf %127, %126 : vector<2x32xf32>
    %129 = arith.divf %127, %128 : vector<2x32xf32>
    %130 = vector.extract_strided_slice %123 {offsets = [0, 128], sizes = [2, 32], strides = [1, 1]} : vector<2x512xf32> to vector<2x32xf32>
    %131 = arith.negf %130 : vector<2x32xf32>
    %132 = math.exp %131 : vector<2x32xf32>
    %cst_27 = arith.constant 1.000000e+00 : f32
    %133 = vector.broadcast %cst_27 : f32 to vector<2x32xf32>
    %134 = arith.addf %133, %132 : vector<2x32xf32>
    %135 = arith.divf %133, %134 : vector<2x32xf32>
    %136 = vector.extract_strided_slice %123 {offsets = [0, 256], sizes = [2, 32], strides = [1, 1]} : vector<2x512xf32> to vector<2x32xf32>
    %137 = math.tanh %136 : vector<2x32xf32>
    %138 = vector.extract_strided_slice %123 {offsets = [0, 384], sizes = [2, 32], strides = [1, 1]} : vector<2x512xf32> to vector<2x32xf32>
    %139 = arith.negf %138 : vector<2x32xf32>
    %140 = math.exp %139 : vector<2x32xf32>
    %cst_28 = arith.constant 1.000000e+00 : f32
    %141 = vector.broadcast %cst_28 : f32 to vector<2x32xf32>
    %142 = arith.addf %141, %140 : vector<2x32xf32>
    %143 = arith.divf %141, %142 : vector<2x32xf32>
    %144 = arith.mulf %135, %118 : vector<2x32xf32>
    %145 = arith.mulf %129, %137 : vector<2x32xf32>
    %146 = arith.addf %144, %145 : vector<2x32xf32>
    %147 = math.tanh %146 : vector<2x32xf32>
    %148 = arith.mulf %143, %147 : vector<2x32xf32>
    %149 = vector.extract_strided_slice %5 {offsets = [40, 0], sizes = [2, 512], strides = [1, 1]} : vector<64x512xf32> to vector<2x512xf32>
    %cst_29 = arith.constant dense<0.000000e+00> : vector<2x512xf32>
    %150 = tpu.matmul %148, %6, %cst_29 {dimension_numbers = #tpu.dot_dimension_numbers<[1], [0], [0], [1], [0, 0, 1, 1], [], []>} : vector<2x32xf32>, vector<32x512xf32>, vector<2x512xf32> -> vector<2x512xf32>
    %151 = arith.addf %149, %150 : vector<2x512xf32>
    %152 = vector.extract_strided_slice %151 {offsets = [0, 0], sizes = [2, 32], strides = [1, 1]} : vector<2x512xf32> to vector<2x32xf32>
    %153 = arith.negf %152 : vector<2x32xf32>
    %154 = math.exp %153 : vector<2x32xf32>
    %cst_30 = arith.constant 1.000000e+00 : f32
    %155 = vector.broadcast %cst_30 : f32 to vector<2x32xf32>
    %156 = arith.addf %155, %154 : vector<2x32xf32>
    %157 = arith.divf %155, %156 : vector<2x32xf32>
    %158 = vector.extract_strided_slice %151 {offsets = [0, 128], sizes = [2, 32], strides = [1, 1]} : vector<2x512xf32> to vector<2x32xf32>
    %159 = arith.negf %158 : vector<2x32xf32>
    %160 = math.exp %159 : vector<2x32xf32>
    %cst_31 = arith.constant 1.000000e+00 : f32
    %161 = vector.broadcast %cst_31 : f32 to vector<2x32xf32>
    %162 = arith.addf %161, %160 : vector<2x32xf32>
    %163 = arith.divf %161, %162 : vector<2x32xf32>
    %164 = vector.extract_strided_slice %151 {offsets = [0, 256], sizes = [2, 32], strides = [1, 1]} : vector<2x512xf32> to vector<2x32xf32>
    %165 = math.tanh %164 : vector<2x32xf32>
    %166 = vector.extract_strided_slice %151 {offsets = [0, 384], sizes = [2, 32], strides = [1, 1]} : vector<2x512xf32> to vector<2x32xf32>
    %167 = arith.negf %166 : vector<2x32xf32>
    %168 = math.exp %167 : vector<2x32xf32>
    %cst_32 = arith.constant 1.000000e+00 : f32
    %169 = vector.broadcast %cst_32 : f32 to vector<2x32xf32>
    %170 = arith.addf %169, %168 : vector<2x32xf32>
    %171 = arith.divf %169, %170 : vector<2x32xf32>
    %172 = arith.mulf %163, %146 : vector<2x32xf32>
    %173 = arith.mulf %157, %165 : vector<2x32xf32>
    %174 = arith.addf %172, %173 : vector<2x32xf32>
    %175 = math.tanh %174 : vector<2x32xf32>
    %176 = arith.mulf %171, %175 : vector<2x32xf32>
    %177 = vector.extract_strided_slice %5 {offsets = [48, 0], sizes = [2, 512], strides = [1, 1]} : vector<64x512xf32> to vector<2x512xf32>
    %cst_33 = arith.constant dense<0.000000e+00> : vector<2x512xf32>
    %178 = tpu.matmul %176, %6, %cst_33 {dimension_numbers = #tpu.dot_dimension_numbers<[1], [0], [0], [1], [0, 0, 1, 1], [], []>} : vector<2x32xf32>, vector<32x512xf32>, vector<2x512xf32> -> vector<2x512xf32>
    %179 = arith.addf %177, %178 : vector<2x512xf32>
    %180 = vector.extract_strided_slice %179 {offsets = [0, 0], sizes = [2, 32], strides = [1, 1]} : vector<2x512xf32> to vector<2x32xf32>
    %181 = arith.negf %180 : vector<2x32xf32>
    %182 = math.exp %181 : vector<2x32xf32>
    %cst_34 = arith.constant 1.000000e+00 : f32
    %183 = vector.broadcast %cst_34 : f32 to vector<2x32xf32>
    %184 = arith.addf %183, %182 : vector<2x32xf32>
    %185 = arith.divf %183, %184 : vector<2x32xf32>
    %186 = vector.extract_strided_slice %179 {offsets = [0, 128], sizes = [2, 32], strides = [1, 1]} : vector<2x512xf32> to vector<2x32xf32>
    %187 = arith.negf %186 : vector<2x32xf32>
    %188 = math.exp %187 : vector<2x32xf32>
    %cst_35 = arith.constant 1.000000e+00 : f32
    %189 = vector.broadcast %cst_35 : f32 to vector<2x32xf32>
    %190 = arith.addf %189, %188 : vector<2x32xf32>
    %191 = arith.divf %189, %190 : vector<2x32xf32>
    %192 = vector.extract_strided_slice %179 {offsets = [0, 256], sizes = [2, 32], strides = [1, 1]} : vector<2x512xf32> to vector<2x32xf32>
    %193 = math.tanh %192 : vector<2x32xf32>
    %194 = vector.extract_strided_slice %179 {offsets = [0, 384], sizes = [2, 32], strides = [1, 1]} : vector<2x512xf32> to vector<2x32xf32>
    %195 = arith.negf %194 : vector<2x32xf32>
    %196 = math.exp %195 : vector<2x32xf32>
    %cst_36 = arith.constant 1.000000e+00 : f32
    %197 = vector.broadcast %cst_36 : f32 to vector<2x32xf32>
    %198 = arith.addf %197, %196 : vector<2x32xf32>
    %199 = arith.divf %197, %198 : vector<2x32xf32>
    %200 = arith.mulf %191, %174 : vector<2x32xf32>
    %201 = arith.mulf %185, %193 : vector<2x32xf32>
    %202 = arith.addf %200, %201 : vector<2x32xf32>
    %203 = math.tanh %202 : vector<2x32xf32>
    %204 = arith.mulf %199, %203 : vector<2x32xf32>
    %205 = vector.extract_strided_slice %5 {offsets = [56, 0], sizes = [2, 512], strides = [1, 1]} : vector<64x512xf32> to vector<2x512xf32>
    %cst_37 = arith.constant dense<0.000000e+00> : vector<2x512xf32>
    %206 = tpu.matmul %204, %6, %cst_37 {dimension_numbers = #tpu.dot_dimension_numbers<[1], [0], [0], [1], [0, 0, 1, 1], [], []>} : vector<2x32xf32>, vector<32x512xf32>, vector<2x512xf32> -> vector<2x512xf32>
    %207 = arith.addf %205, %206 : vector<2x512xf32>
    %208 = vector.extract_strided_slice %207 {offsets = [0, 0], sizes = [2, 32], strides = [1, 1]} : vector<2x512xf32> to vector<2x32xf32>
    %209 = arith.negf %208 : vector<2x32xf32>
    %210 = math.exp %209 : vector<2x32xf32>
    %cst_38 = arith.constant 1.000000e+00 : f32
    %211 = vector.broadcast %cst_38 : f32 to vector<2x32xf32>
    %212 = arith.addf %211, %210 : vector<2x32xf32>
    %213 = arith.divf %211, %212 : vector<2x32xf32>
    %214 = vector.extract_strided_slice %207 {offsets = [0, 128], sizes = [2, 32], strides = [1, 1]} : vector<2x512xf32> to vector<2x32xf32>
    %215 = arith.negf %214 : vector<2x32xf32>
    %216 = math.exp %215 : vector<2x32xf32>
    %cst_39 = arith.constant 1.000000e+00 : f32
    %217 = vector.broadcast %cst_39 : f32 to vector<2x32xf32>
    %218 = arith.addf %217, %216 : vector<2x32xf32>
    %219 = arith.divf %217, %218 : vector<2x32xf32>
    %220 = vector.extract_strided_slice %207 {offsets = [0, 256], sizes = [2, 32], strides = [1, 1]} : vector<2x512xf32> to vector<2x32xf32>
    %221 = math.tanh %220 : vector<2x32xf32>
    %222 = vector.extract_strided_slice %207 {offsets = [0, 384], sizes = [2, 32], strides = [1, 1]} : vector<2x512xf32> to vector<2x32xf32>
    %223 = arith.negf %222 : vector<2x32xf32>
    %224 = math.exp %223 : vector<2x32xf32>
    %cst_40 = arith.constant 1.000000e+00 : f32
    %225 = vector.broadcast %cst_40 : f32 to vector<2x32xf32>
    %226 = arith.addf %225, %224 : vector<2x32xf32>
    %227 = arith.divf %225, %226 : vector<2x32xf32>
    %228 = arith.mulf %219, %202 : vector<2x32xf32>
    %229 = arith.mulf %213, %221 : vector<2x32xf32>
    %230 = arith.addf %228, %229 : vector<2x32xf32>
    %231 = math.tanh %230 : vector<2x32xf32>
    %232 = arith.mulf %227, %231 : vector<2x32xf32>
    %c0_41 = arith.constant 0 : index
    %c0_42 = arith.constant 0 : index
    %233 = vector.load %arg5[%c0_41, %c0_42] : memref<32x128xf32, #tpu.memory_space<vmem>>, vector<32x128xf32>
    %cst_43 = arith.constant dense<0.000000e+00> : vector<2x128xf32>
    %234 = tpu.matmul %232, %233, %cst_43 {dimension_numbers = #tpu.dot_dimension_numbers<[1], [0], [0], [1], [0, 0, 1, 1], [], []>} : vector<2x32xf32>, vector<32x128xf32>, vector<2x128xf32> -> vector<2x128xf32>
    %c0_44 = arith.constant 0 : index
    %c0_45 = arith.constant 0 : index
    %235 = vector.load %arg6[%c0_44, %c0_45] : memref<1x128xf32, #tpu.memory_space<vmem>>, vector<1x128xf32>
    %236 = vector.broadcast %235 : vector<1x128xf32> to vector<2x128xf32>
    %237 = arith.addf %234, %236 : vector<2x128xf32>
    %cst_46 = arith.constant 0.000000e+00 : f32
    %238 = vector.broadcast %cst_46 : f32 to vector<2x128xf32>
    %239 = arith.cmpf ogt, %237, %238 : vector<2x128xf32>
    %cst_47 = arith.constant 0.00999999977 : f32
    %240 = vector.broadcast %cst_47 : f32 to vector<2x128xf32>
    %241 = arith.mulf %240, %237 : vector<2x128xf32>
    %242 = arith.select %239, %237, %241 : vector<2x128xi1>, vector<2x128xf32>
    %c0_48 = arith.constant 0 : index
    %c0_49 = arith.constant 0 : index
    %243 = vector.load %arg7[%c0_48, %c0_49] : memref<2x128xf32, #tpu.memory_space<vmem>>, vector<2x128xf32>
    tpu.vector_store %arg7[%c0_48, %c0_49], %242 {strides = array<i32>} : memref<2x128xf32, #tpu.memory_space<vmem>>, vector<2x128xf32>,
    return
  }
  func.func @transform_0(%arg0: i32) -> (i32, i32) {
    %c0_i32 = arith.constant 0 : i32
    %c0_i32_0 = arith.constant 0 : i32
    %c0_i32_1 = arith.constant 0 : i32
    return %c0_i32, %c0_i32_0 : i32, i32
  }
  func.func @transform_1(%arg0: i32) -> (i32, i32) {
    %c0_i32 = arith.constant 0 : i32
    %c0_i32_0 = arith.constant 0 : i32
    %c0_i32_1 = arith.constant 0 : i32
    return %c0_i32, %c0_i32_0 : i32, i32
  }
  func.func @transform_2(%arg0: i32) -> (i32, i32) {
    %c0_i32 = arith.constant 0 : i32
    %c0_i32_0 = arith.constant 0 : i32
    %c0_i32_1 = arith.constant 0 : i32
    return %c0_i32, %c0_i32_0 : i32, i32
  }
  func.func @transform_3(%arg0: i32) -> (i32, i32) {
    %c0_i32 = arith.constant 0 : i32
    %c0_i32_0 = arith.constant 0 : i32
    %c0_i32_1 = arith.constant 0 : i32
    return %c0_i32, %c0_i32_0 : i32, i32
  }
  func.func @transform_4(%arg0: i32) -> (i32, i32) {
    %c0_i32 = arith.constant 0 : i32
    %c0_i32_0 = arith.constant 0 : i32
    %c0_i32_1 = arith.constant 0 : i32
    return %c0_i32, %c0_i32_0 : i32, i32
  }
  func.func @transform_5(%arg0: i32) -> (i32, i32) {
    %c0_i32 = arith.constant 0 : i32
    %c0_i32_0 = arith.constant 0 : i32
    %c0_i32_1 = arith.constant 0 : i32
    return %c0_i32, %c0_i32_0 : i32, i32
  }
  func.func @transform_6(%arg0: i32) -> (i32, i32) {
    %c0_i32 = arith.constant 0 : i32
    %c0_i32_0 = arith.constant 0 : i32
    %c0_i32_1 = arith.constant 0 : i32
    return %c0_i32, %c0_i32_0 : i32, i32
  }
}

</mosaic_0001>

<llo_original>
// kernel: tpu_custom_call.1
$region0: #{tpu_custom_call.1}
  #allocation0 [shape = 'u32[]', space=smem, size = 0x4, offset = 0x4, fixed_abs, tag = 'smem constant byte address 0x4 - core index']
  #allocation1 [shape = 'u32[144,128]{1,0:T(1,128)}', space=vmem, size = 0x12000, scoped, tag = 'internal scratch']
  %s0 = inlined_call_operand.vmem [shape: f32[64,4], index: 0, kind: input, shape index: {}]
  %s1 = inlined_call_operand.vmem [shape: f32[4,512], index: 1, kind: input, shape index: {}]
  %s2 = inlined_call_operand.hbm [shape: f32[32,512], index: 2, kind: input, shape index: {}]
  %s3 = inlined_call_operand.vmem [shape: f32[1,512], index: 3, kind: input, shape index: {}]
  %s4 = inlined_call_operand.vmem [shape: f32[32,128], index: 4, kind: input, shape index: {}]
  %s5 = inlined_call_operand.vmem [shape: f32[1,128], index: 5, kind: input, shape index: {}]
  %s6 = inlined_call_operand.hbm [shape: f32[2,128], index: 6, kind: output, shape index: {}]
  %s7 = sld [smem:[#allocation0]]
  $region38: #{tpu_custom_call.1} parent=0
    _
  %s9 = ssub.s32 1, %s7
  %s10 = scalar_select 0, %s9, %s7
  $region1: #{tpu_custom_call.1} parent=0
    #allocation2 [shape = 'u8[65536]{0}', space=vmem, size = 0x10000, scoped, tag = 'input window, operand 2, single buffered']
    #allocation3 [shape = 's32[1]{0}', space=sflag, size = 0x4, scoped, tag = 'scoped memory for tpu_custom_call.1']
    #allocation4 [shape = 's32[1]{0}', space=sflag, size = 0x4, scoped, tag = 'scoped memory for tpu_custom_call.1']
    #allocation5 [shape = 'u8[1024]{0}', space=vmem, size = 0x400, scoped, tag = 'output window, operand 0, single buffered']
    %11 = vsyncpa [#allocation3], 0
    %12 = vsyncpa [#allocation4], 0
    // Predicated region
    $region2: #{tpu_custom_call.1} parent=1 // pred_check
      _
    $region3: #{tpu_custom_call.1} parent=1 // pred_check_branch
      %14 = sbr.rel (0) target = $region5
    $region4: #{tpu_custom_call.1} parent=1 // pred_region
      _
    $region5: #{tpu_custom_call.1} parent=1 // pred_fallthru
      _
    // Predicated region
    $region6: #{tpu_custom_call.1} parent=1 // pred_check
      _
    $region7: #{tpu_custom_call.1} parent=1 // pred_check_branch
      %16 = sbr.rel (0) target = $region9
    $region8: #{tpu_custom_call.1} parent=1 // pred_region
      _
    $region9: #{tpu_custom_call.1} parent=1 // pred_fallthru
      _
    // Predicated region
    $region10: #{tpu_custom_call.1} parent=1 // pred_check
      _
    $region11: #{tpu_custom_call.1} parent=1 // pred_check_branch
      %18 = sbr.rel (0) target = $region13
    $region12: #{tpu_custom_call.1} parent=1 // pred_region
      %s20 = ssub.s32 2048, 2048
      %21 = vsyncadd [#allocation3], %s20
      %s22 = sshll.u32 [#allocation2], 4
      %s23 = int_to_ptr.vmem [resolvable:$true] %s22
      %28 = dma.hbm_to_vmem [thread:$0]  %s2, 2048, %s23, [#allocation3], 512, 512, 32
    $region13: #{tpu_custom_call.1} parent=1 // pred_fallthru
      _
    // Predicated region
    $region14: #{tpu_custom_call.1} parent=1 // pred_check
      _
    $region15: #{tpu_custom_call.1} parent=1 // pred_check_branch
      %30 = sbr.rel (0) target = $region17
    $region16: #{tpu_custom_call.1} parent=1 // pred_region
      _
    $region17: #{tpu_custom_call.1} parent=1 // pred_fallthru
      _
    // Predicated region
    $region18: #{tpu_custom_call.1} parent=1 // pred_check
      _
    $region19: #{tpu_custom_call.1} parent=1 // pred_check_branch
      %32 = sbr.rel (0) target = $region21
    $region20: #{tpu_custom_call.1} parent=1 // pred_region
      _
    $region21: #{tpu_custom_call.1} parent=1 // pred_fallthru
      _
    // Predicated region
    $region22: #{tpu_custom_call.1} parent=1 // pred_check
      _
    $region23: #{tpu_custom_call.1} parent=1 // pred_check_branch
      %34 = sbr.rel (0) target = $region25
    $region24: #{tpu_custom_call.1} parent=1 // pred_region
      _
    $region25: #{tpu_custom_call.1} parent=1 // pred_fallthru
      _
    // Predicated region
    $region26: #{tpu_custom_call.1} parent=1 // pred_check
      _
    $region27: #{tpu_custom_call.1} parent=1 // pred_check_branch
      %36 = sbr.rel (0) target = $region29
    $region28: #{tpu_custom_call.1} parent=1 // pred_region
      %37 = dma.done [#allocation3], 2048
    $region29: #{tpu_custom_call.1} parent=1 // pred_fallthru
      _
    %v38 = vld [vmem:[%s0] sm:$0xff]
    %v39 = vld [vmem:[%s0 + $0x8] sm:$0xff]
    %v40 = vld [vmem:[%s0 + $0x10] sm:$0xff]
    %v41 = vld [vmem:[%s0 + $0x18] sm:$0xff]
    %v42 = vld [vmem:[%s0 + $0x20] sm:$0xff]
    %v43 = vld [vmem:[%s0 + $0x28] sm:$0xff]
    %v44 = vld [vmem:[%s0 + $0x30] sm:$0xff]
    %v45 = vld [vmem:[%s0 + $0x38] sm:$0xff]
    %v46 = vld [vmem:[%s1] sm:$0xff]
    %v47 = vld [vmem:[%s1 + $0x8] sm:$0xff]
    %v48 = vld [vmem:[%s3] sm:$0xf]
    %v50 = vlaneseq
    %v51 = vshrl.u32 %v50, 7
    %v52 = vsub.s32 0, %v51
    %v53 = vrot.slane %v48, %v52
    %v54 = vlaneseq
    %v55 = vshrl.u32 %v54, 7
    %v56 = vsub.s32 1, %v55
    %v57 = vrot.slane %v48, %v56
    %v58 = vlaneseq
    %v59 = vshrl.u32 %v58, 7
    %v60 = vsub.s32 2, %v59
    %v61 = vrot.slane %v48, %v60
    %v62 = vlaneseq
    %v63 = vshrl.u32 %v62, 7
    %v64 = vsub.s32 3, %v63
    %v65 = vrot.slane %v48, %v64
    %v72 = vcombine.high %v46, %v46
    %v73 = vcombine.high %v47, %v47
    %vm74 = vcmask 31744
    %v76 = vsel %vm74, %v38, 0
    %v79 = vsel %vm74, %v39, 0
    %v82 = vsel %vm74, %v40, 0
    %v85 = vsel %vm74, %v41, 0
    %v88 = vsel %vm74, %v42, 0
    %v91 = vsel %vm74, %v43, 0
    %v94 = vsel %vm74, %v44, 0
    %v97 = vsel %vm74, %v45, 0
    %vm99 = vcmask 1043456
    %v100 = vsel %vm99, %v46, 0
    %v102 = vsel %vm99, %v72, 0
    %v104 = vsel %vm99, %v47, 0
    %v106 = vsel %vm99, %v73, 0
    %108 = vmatprep.subr.mxu0 %v102
    %109 = vmatpush1.msra.mxu0 %v100
    %110 = vmatprep.subr.mxu0 0.0
    %111 = vmatpush1.msra.mxu0 0.0
    %112 = vmatprep.subr.mxu0 0.0
    %113 = vmatpush1.msra.mxu0 0.0
    %114 = vmatprep.subr.mxu0 0.0
    %115 = vmatpush1.msra.mxu0 0.0
    %116 = vmatprep.subr.mxu0 0.0
    %117 = vmatpush1.msra.mxu0 0.0
    %118 = vmatprep.subr.mxu0 0.0
    %119 = vmatpush1.msra.mxu0 0.0
    %120 = vmatprep.subr.mxu0 0.0
    %121 = vmatpush1.msra.mxu0 0.0
    %122 = vmatprep.subr.mxu0 0.0
    %123 = vmatpush1.msra.mxu0 0.0
    %124 = vmatprep.subr.mxu0 0.0
    %125 = vmatpush1.msra.mxu0 0.0
    %126 = vmatprep.subr.mxu0 0.0
    %127 = vmatpush1.msra.mxu0 0.0
    %128 = vmatprep.subr.mxu0 0.0
    %129 = vmatpush1.msra.mxu0 0.0
    %130 = vmatprep.subr.mxu0 0.0
    %131 = vmatpush1.msra.mxu0 0.0
    %132 = vmatprep.subr.mxu0 0.0
    %133 = vmatpush1.msra.mxu0 0.0
    %134 = vmatprep.subr.mxu0 0.0
    %135 = vmatpush1.msra.mxu0 0.0
    %136 = vmatprep.subr.mxu0 0.0
    %137 = vmatpush1.msra.mxu0 0.0
    %138 = vmatprep.subr.mxu0 0.0
    %139 = vmatpush1.msra.mxu0 0.0
    %140 = vmatprep.subr.mxu0 0.0
    %141 = vmatpush1.msra.mxu0 0.0
    %142 = vmatprep.subr.mxu0 0.0
    %143 = vmatpush1.msra.mxu0 0.0
    %144 = vmatprep.subr.mxu0 0.0
    %145 = vmatpush1.msra.mxu0 0.0
    %146 = vmatprep.subr.mxu0 0.0
    %147 = vmatpush1.msra.mxu0 0.0
    %148 = vmatprep.subr.mxu0 0.0
    %149 = vmatpush1.msra.mxu0 0.0
    %150 = vmatprep.subr.mxu0 0.0
    %151 = vmatpush1.msra.mxu0 0.0
    %152 = vmatprep.subr.mxu0 0.0
    %153 = vmatpush1.msra.mxu0 0.0
    %154 = vmatprep.subr.mxu0 0.0
    %155 = vmatpush1.msra.mxu0 0.0
    %156 = vmatprep.subr.mxu0 0.0
    %157 = vmatpush1.msra.mxu0 0.0
    %158 = vmatprep.subr.mxu0 0.0
    %159 = vmatpush1.msra.mxu0 0.0
    %160 = vmatprep.subr.mxu0 0.0
    %161 = vmatpush1.msra.mxu0 0.0
    %162 = vmatprep.subr.mxu0 0.0
    %163 = vmatpush1.msra.mxu0 0.0
    %164 = vmatprep.subr.mxu0 0.0
    %165 = vmatpush1.msra.mxu0 0.0
    %166 = vmatprep.subr.mxu0 0.0
    %167 = vmatpush1.msra.mxu0 0.0
    %168 = vmatprep.subr.mxu0 0.0
    %169 = vmatpush1.msra.mxu0 0.0
    %170 = vmatprep.subr.mxu0 0.0
    %171 = vmatpush1.msra.mxu0 0.0
    %172 = vmatprep.mubr.f32.mxu0 0.0
    %173 = vmatmul.mubr.f32.gmra.mrb[0].mxu0 %v76
    %v174 = vpop.f32.mrb[0].mxu0
    %v175 = vadd.f32 %v53, %v174
    %v176 = vpop.f32.mrb[0].mxu0
    %v177 = vadd.f32 %v57, %v176
    %178 = vmatprep.mubr.f32.mxu0 0.0
    %179 = vmatmul.mubr.f32.gmra.mrb[0].mxu0 %v79
    %v180 = vpop.f32.mrb[0].mxu0
    %v181 = vadd.f32 %v53, %v180
    %v182 = vpop.f32.mrb[0].mxu0
    %v183 = vadd.f32 %v57, %v182
    %184 = vmatprep.mubr.f32.mxu0 0.0
    %185 = vmatmul.mubr.f32.gmra.mrb[0].mxu0 %v82
    %v186 = vpop.f32.mrb[0].mxu0
    %v187 = vadd.f32 %v53, %v186
    %v188 = vpop.f32.mrb[0].mxu0
    %v189 = vadd.f32 %v57, %v188
    %190 = vmatprep.mubr.f32.mxu0 0.0
    %191 = vmatmul.mubr.f32.gmra.mrb[0].mxu0 %v85
    %v192 = vpop.f32.mrb[0].mxu0
    %v193 = vadd.f32 %v53, %v192
    %v194 = vpop.f32.mrb[0].mxu0
    %v195 = vadd.f32 %v57, %v194
    %196 = vmatprep.mubr.f32.mxu0 0.0
    %197 = vmatmul.mubr.f32.gmra.mrb[0].mxu0 %v88
    %v198 = vpop.f32.mrb[0].mxu0
    %v199 = vadd.f32 %v53, %v198
    %v200 = vpop.f32.mrb[0].mxu0
    %v201 = vadd.f32 %v57, %v200
    %202 = vmatprep.mubr.f32.mxu0 0.0
    %203 = vmatmul.mubr.f32.gmra.mrb[0].mxu0 %v91
    %v204 = vpop.f32.mrb[0].mxu0
    %v205 = vadd.f32 %v53, %v204
    %v206 = vpop.f32.mrb[0].mxu0
    %v207 = vadd.f32 %v57, %v206
    %208 = vmatprep.mubr.f32.mxu0 0.0
    %209 = vmatmul.mubr.f32.gmra.mrb[0].mxu0 %v94
    %v210 = vpop.f32.mrb[0].mxu0
    %v211 = vadd.f32 %v53, %v210
    %v212 = vpop.f32.mrb[0].mxu0
    %v213 = vadd.f32 %v57, %v212
    %214 = vmatprep.mubr.f32.mxu0 0.0
    %215 = vmatmul.mubr.f32.gmra.mrb[0].mxu0 %v97
    %v216 = vpop.f32.mrb[0].mxu0
    %v217 = vadd.f32 %v53, %v216
    %v218 = vpop.f32.mrb[0].mxu0
    %v219 = vadd.f32 %v57, %v218
    %220 = vdwg.mxu0
    %221 = vmatprep.subr.mxu0 %v106
    %222 = vmatpush1.msra.mxu0 %v104
    %223 = vmatprep.subr.mxu0 0.0
    %224 = vmatpush1.msra.mxu0 0.0
    %225 = vmatprep.subr.mxu0 0.0
    %226 = vmatpush1.msra.mxu0 0.0
    %227 = vmatprep.subr.mxu0 0.0
    %228 = vmatpush1.msra.mxu0 0.0
    %229 = vmatprep.subr.mxu0 0.0
    %230 = vmatpush1.msra.mxu0 0.0
    %231 = vmatprep.subr.mxu0 0.0
    %232 = vmatpush1.msra.mxu0 0.0
    %233 = vmatprep.subr.mxu0 0.0
    %234 = vmatpush1.msra.mxu0 0.0
    %235 = vmatprep.subr.mxu0 0.0
    %236 = vmatpush1.msra.mxu0 0.0
    %237 = vmatprep.subr.mxu0 0.0
    %238 = vmatpush1.msra.mxu0 0.0
    %239 = vmatprep.subr.mxu0 0.0
    %240 = vmatpush1.msra.mxu0 0.0
    %241 = vmatprep.subr.mxu0 0.0
    %242 = vmatpush1.msra.mxu0 0.0
    %243 = vmatprep.subr.mxu0 0.0
    %244 = vmatpush1.msra.mxu0 0.0
    %245 = vmatprep.subr.mxu0 0.0
    %246 = vmatpush1.msra.mxu0 0.0
    %247 = vmatprep.subr.mxu0 0.0
    %248 = vmatpush1.msra.mxu0 0.0
    %249 = vmatprep.subr.mxu0 0.0
    %250 = vmatpush1.msra.mxu0 0.0
    %251 = vmatprep.subr.mxu0 0.0
    %252 = vmatpush1.msra.mxu0 0.0
    %253 = vmatprep.subr.mxu0 0.0
    %254 = vmatpush1.msra.mxu0 0.0
    %255 = vmatprep.subr.mxu0 0.0
    %256 = vmatpush1.msra.mxu0 0.0
    %257 = vmatprep.subr.mxu0 0.0
    %258 = vmatpush1.msra.mxu0 0.0
    %259 = vmatprep.subr.mxu0 0.0
    %260 = vmatpush1.msra.mxu0 0.0
    %261 = vmatprep.subr.mxu0 0.0
    %262 = vmatpush1.msra.mxu0 0.0
    %263 = vmatprep.subr.mxu0 0.0
    %264 = vmatpush1.msra.mxu0 0.0
    %265 = vmatprep.subr.mxu0 0.0
    %266 = vmatpush1.msra.mxu0 0.0
    %267 = vmatprep.subr.mxu0 0.0
    %268 = vmatpush1.msra.mxu0 0.0
    %269 = vmatprep.subr.mxu0 0.0
    %270 = vmatpush1.msra.mxu0 0.0
    %271 = vmatprep.subr.mxu0 0.0
    %272 = vmatpush1.msra.mxu0 0.0
    %273 = vmatprep.subr.mxu0 0.0
    %274 = vmatpush1.msra.mxu0 0.0
    %275 = vmatprep.subr.mxu0 0.0
    %276 = vmatpush1.msra.mxu0 0.0
    %277 = vmatprep.subr.mxu0 0.0
    %278 = vmatpush1.msra.mxu0 0.0
    %279 = vmatprep.subr.mxu0 0.0
    %280 = vmatpush1.msra.mxu0 0.0
    %281 = vmatprep.subr.mxu0 0.0
    %282 = vmatpush1.msra.mxu0 0.0
    %283 = vmatprep.subr.mxu0 0.0
    %284 = vmatpush1.msra.mxu0 0.0
    %285 = vmatprep.mubr.f32.mxu0 0.0
    %286 = vmatmul.mubr.f32.gmra.mrb[0].mxu0 %v76
    %v287 = vpop.f32.mrb[0].mxu0
    %v288 = vadd.f32 %v61, %v287
    %v289 = vpop.f32.mrb[0].mxu0
    %v290 = vadd.f32 %v65, %v289
    %291 = vmatprep.mubr.f32.mxu0 0.0
    %292 = vmatmul.mubr.f32.gmra.mrb[0].mxu0 %v79
    %v293 = vpop.f32.mrb[0].mxu0
    %v294 = vadd.f32 %v61, %v293
    %v295 = vpop.f32.mrb[0].mxu0
    %v296 = vadd.f32 %v65, %v295
    %297 = vmatprep.mubr.f32.mxu0 0.0
    %298 = vmatmul.mubr.f32.gmra.mrb[0].mxu0 %v82
    %v299 = vpop.f32.mrb[0].mxu0
    %v300 = vadd.f32 %v61, %v299
    %v301 = vpop.f32.mrb[0].mxu0
    %v302 = vadd.f32 %v65, %v301
    %303 = vmatprep.mubr.f32.mxu0 0.0
    %304 = vmatmul.mubr.f32.gmra.mrb[0].mxu0 %v85
    %v305 = vpop.f32.mrb[0].mxu0
    %v306 = vadd.f32 %v61, %v305
    %v307 = vpop.f32.mrb[0].mxu0
    %v308 = vadd.f32 %v65, %v307
    %309 = vmatprep.mubr.f32.mxu0 0.0
    %310 = vmatmul.mubr.f32.gmra.mrb[0].mxu0 %v88
    %v311 = vpop.f32.mrb[0].mxu0
    %v312 = vadd.f32 %v61, %v311
    %v313 = vpop.f32.mrb[0].mxu0
    %v314 = vadd.f32 %v65, %v313
    %315 = vmatprep.mubr.f32.mxu0 0.0
    %316 = vmatmul.mubr.f32.gmra.mrb[0].mxu0 %v91
    %v317 = vpop.f32.mrb[0].mxu0
    %v318 = vadd.f32 %v61, %v317
    %v319 = vpop.f32.mrb[0].mxu0
    %v320 = vadd.f32 %v65, %v319
    %321 = vmatprep.mubr.f32.mxu0 0.0
    %322 = vmatmul.mubr.f32.gmra.mrb[0].mxu0 %v94
    %v323 = vpop.f32.mrb[0].mxu0
    %v324 = vadd.f32 %v61, %v323
    %v325 = vpop.f32.mrb[0].mxu0
    %v326 = vadd.f32 %v65, %v325
    %327 = vmatprep.mubr.f32.mxu0 0.0
    %328 = vmatmul.mubr.f32.gmra.mrb[0].mxu0 %v97
    %v329 = vpop.f32.mrb[0].mxu0
    %v330 = vadd.f32 %v61, %v329
    %v331 = vpop.f32.mrb[0].mxu0
    %v332 = vadd.f32 %v65, %v331
    %333 = vdwg.mxu0
    %v334 = vld [vmem:[#allocation2] sm:$0xff]
    %v335 = vld [vmem:[#allocation2 + $0x8] sm:$0xff]
    %v336 = vld [vmem:[#allocation2 + $0x10] sm:$0xff]
    %v337 = vld [vmem:[#allocation2 + $0x18] sm:$0xff]
    %v338 = vld [vmem:[#allocation2 + $0x20] sm:$0xff]
    %v339 = vld [vmem:[#allocation2 + $0x28] sm:$0xff]
    %v340 = vld [vmem:[#allocation2 + $0x30] sm:$0xff]
    %v341 = vld [vmem:[#allocation2 + $0x38] sm:$0xff]
    %v342 = vld [vmem:[#allocation2 + $0x40] sm:$0xff]
    %v343 = vld [vmem:[#allocation2 + $0x48] sm:$0xff]
    %v344 = vld [vmem:[#allocation2 + $0x50] sm:$0xff]
    %v345 = vld [vmem:[#allocation2 + $0x58] sm:$0xff]
    %v346 = vld [vmem:[#allocation2 + $0x60] sm:$0xff]
    %v347 = vld [vmem:[#allocation2 + $0x68] sm:$0xff]
    %v348 = vld [vmem:[#allocation2 + $0x70] sm:$0xff]
    %v349 = vld [vmem:[#allocation2 + $0x78] sm:$0xff]
    %vm350 = vcmask 261120
    %v352 = vsel %vm350, 0.0, 0
    %354 = vmatprep.subr.mxu0 %v335
    %355 = vmatpush1.msra.mxu0 %v334
    %356 = vmatprep.subr.mxu0 %v339
    %357 = vmatpush1.msra.mxu0 %v338
    %358 = vmatprep.subr.mxu0 %v343
    %359 = vmatpush1.msra.mxu0 %v342
    %360 = vmatprep.subr.mxu0 %v347
    %361 = vmatpush1.msra.mxu0 %v346
    %362 = vmatprep.subr.mxu0 0.0
    %363 = vmatpush1.msra.mxu0 0.0
    %364 = vmatprep.subr.mxu0 0.0
    %365 = vmatpush1.msra.mxu0 0.0
    %366 = vmatprep.subr.mxu0 0.0
    %367 = vmatpush1.msra.mxu0 0.0
    %368 = vmatprep.subr.mxu0 0.0
    %369 = vmatpush1.msra.mxu0 0.0
    %370 = vmatprep.subr.mxu0 0.0
    %371 = vmatpush1.msra.mxu0 0.0
    %372 = vmatprep.subr.mxu0 0.0
    %373 = vmatpush1.msra.mxu0 0.0
    %374 = vmatprep.subr.mxu0 0.0
    %375 = vmatpush1.msra.mxu0 0.0
    %376 = vmatprep.subr.mxu0 0.0
    %377 = vmatpush1.msra.mxu0 0.0
    %378 = vmatprep.subr.mxu0 0.0
    %379 = vmatpush1.msra.mxu0 0.0
    %380 = vmatprep.subr.mxu0 0.0
    %381 = vmatpush1.msra.mxu0 0.0
    %382 = vmatprep.subr.mxu0 0.0
    %383 = vmatpush1.msra.mxu0 0.0
    %384 = vmatprep.subr.mxu0 0.0
    %385 = vmatpush1.msra.mxu0 0.0
    %386 = vmatprep.subr.mxu0 0.0
    %387 = vmatpush1.msra.mxu0 0.0
    %388 = vmatprep.subr.mxu0 0.0
    %389 = vmatpush1.msra.mxu0 0.0
    %390 = vmatprep.subr.mxu0 0.0
    %391 = vmatpush1.msra.mxu0 0.0
    %392 = vmatprep.subr.mxu0 0.0
    %393 = vmatpush1.msra.mxu0 0.0
    %394 = vmatprep.subr.mxu0 0.0
    %395 = vmatpush1.msra.mxu0 0.0
    %396 = vmatprep.subr.mxu0 0.0
    %397 = vmatpush1.msra.mxu0 0.0
    %398 = vmatprep.subr.mxu0 0.0
    %399 = vmatpush1.msra.mxu0 0.0
    %400 = vmatprep.subr.mxu0 0.0
    %401 = vmatpush1.msra.mxu0 0.0
    %402 = vmatprep.subr.mxu0 0.0
    %403 = vmatpush1.msra.mxu0 0.0
    %404 = vmatprep.subr.mxu0 0.0
    %405 = vmatpush1.msra.mxu0 0.0
    %406 = vmatprep.subr.mxu0 0.0
    %407 = vmatpush1.msra.mxu0 0.0
    %408 = vmatprep.subr.mxu0 0.0
    %409 = vmatpush1.msra.mxu0 0.0
    %410 = vmatprep.subr.mxu0 0.0
    %411 = vmatpush1.msra.mxu0 0.0
    %412 = vmatprep.subr.mxu0 0.0
    %413 = vmatpush1.msra.mxu0 0.0
    %414 = vmatprep.subr.mxu0 0.0
    %415 = vmatpush1.msra.mxu0 0.0
    %416 = vmatprep.subr.mxu0 0.0
    %417 = vmatpush1.msra.mxu0 0.0
    %418 = vmatprep.mubr.f32.mxu0 0.0
    %419 = vmatmul.mubr.f32.gmra.mrb[0].mxu0 %v352
    %v420 = vpop.f32.mrb[0].mxu0
    %v421 = vadd.f32 0.0, %v420
    %v422 = vpop.f32.mrb[0].mxu0
    %v423 = vadd.f32 0.0, %v422
    %424 = vdwg.mxu0
    %425 = vmatprep.subr.mxu0 %v337
    %426 = vmatpush1.msra.mxu0 %v336
    %427 = vmatprep.subr.mxu0 %v341
    %428 = vmatpush1.msra.mxu0 %v340
    %429 = vmatprep.subr.mxu0 %v345
    %430 = vmatpush1.msra.mxu0 %v344
    %431 = vmatprep.subr.mxu0 %v349
    %432 = vmatpush1.msra.mxu0 %v348
    %433 = vmatprep.subr.mxu0 0.0
    %434 = vmatpush1.msra.mxu0 0.0
    %435 = vmatprep.subr.mxu0 0.0
    %436 = vmatpush1.msra.mxu0 0.0
    %437 = vmatprep.subr.mxu0 0.0
    %438 = vmatpush1.msra.mxu0 0.0
    %439 = vmatprep.subr.mxu0 0.0
    %440 = vmatpush1.msra.mxu0 0.0
    %441 = vmatprep.subr.mxu0 0.0
    %442 = vmatpush1.msra.mxu0 0.0
    %443 = vmatprep.subr.mxu0 0.0
    %444 = vmatpush1.msra.mxu0 0.0
    %445 = vmatprep.subr.mxu0 0.0
    %446 = vmatpush1.msra.mxu0 0.0
    %447 = vmatprep.subr.mxu0 0.0
    %448 = vmatpush1.msra.mxu0 0.0
    %449 = vmatprep.subr.mxu0 0.0
    %450 = vmatpush1.msra.mxu0 0.0
    %451 = vmatprep.subr.mxu0 0.0
    %452 = vmatpush1.msra.mxu0 0.0
    %453 = vmatprep.subr.mxu0 0.0
    %454 = vmatpush1.msra.mxu0 0.0
    %455 = vmatprep.subr.mxu0 0.0
    %456 = vmatpush1.msra.mxu0 0.0
    %457 = vmatprep.subr.mxu0 0.0
    %458 = vmatpush1.msra.mxu0 0.0
    %459 = vmatprep.subr.mxu0 0.0
    %460 = vmatpush1.msra.mxu0 0.0
    %461 = vmatprep.subr.mxu0 0.0
    %462 = vmatpush1.msra.mxu0 0.0
    %463 = vmatprep.subr.mxu0 0.0
    %464 = vmatpush1.msra.mxu0 0.0
    %465 = vmatprep.subr.mxu0 0.0
    %466 = vmatpush1.msra.mxu0 0.0
    %467 = vmatprep.subr.mxu0 0.0
    %468 = vmatpush1.msra.mxu0 0.0
    %469 = vmatprep.subr.mxu0 0.0
    %470 = vmatpush1.msra.mxu0 0.0
    %471 = vmatprep.subr.mxu0 0.0
    %472 = vmatpush1.msra.mxu0 0.0
    %473 = vmatprep.subr.mxu0 0.0
    %474 = vmatpush1.msra.mxu0 0.0
    %475 = vmatprep.subr.mxu0 0.0
    %476 = vmatpush1.msra.mxu0 0.0
    %477 = vmatprep.subr.mxu0 0.0
    %478 = vmatpush1.msra.mxu0 0.0
    %479 = vmatprep.subr.mxu0 0.0
    %480 = vmatpush1.msra.mxu0 0.0
    %481 = vmatprep.subr.mxu0 0.0
    %482 = vmatpush1.msra.mxu0 0.0
    %483 = vmatprep.subr.mxu0 0.0
    %484 = vmatpush1.msra.mxu0 0.0
    %485 = vmatprep.subr.mxu0 0.0
    %486 = vmatpush1.msra.mxu0 0.0
    %487 = vmatprep.subr.mxu0 0.0
    %488 = vmatpush1.msra.mxu0 0.0
    %489 = vmatprep.mubr.f32.mxu0 0.0
    %490 = vmatmul.mubr.f32.gmra.mrb[0].mxu0 %v352
    %v491 = vpop.f32.mrb[0].mxu0
    %v492 = vadd.f32 0.0, %v491
    %v493 = vpop.f32.mrb[0].mxu0
    %v494 = vadd.f32 0.0, %v493
    %495 = vdwg.mxu0
    %v496 = vadd.f32 %v175, %v421
    %v497 = vadd.f32 %v177, %v423
    %v498 = vadd.f32 %v288, %v492
    %v499 = vadd.f32 %v290, %v494
    %v500 = vxor.u32 %v496, 2147483648
    %v501 = vmul.f32 %v500, 1.442695
    %v502 = vpow.pop %v501
    %v503 = vadd.f32 %v502, 1.0
    %v504 = vrcp.pop %v503
    %v505 = vmul.f32 1.0, %v504
    %v506 = vxor.u32 %v497, 2147483648
    %v507 = vmul.f32 %v506, 1.442695
    %v508 = vpow.pop %v507
    %v509 = vadd.f32 %v508, 1.0
    %v510 = vrcp.pop %v509
    %v511 = vmul.f32 1.0, %v510
    %v512 = vtanh.pop %v498
    %v513 = vxor.u32 %v499, 2147483648
    %v514 = vmul.f32 %v513, 1.442695
    %v515 = vpow.pop %v514
    %v516 = vadd.f32 %v515, 1.0
    %v517 = vrcp.pop %v516
    %v518 = vmul.f32 1.0, %v517
    %v519 = vmul.f32 %v511, 0.0
    %v520 = vmul.f32 %v505, %v512
    %v521 = vadd.f32 %v519, %v520
    %v522 = vtanh.pop %v521
    %v523 = vmul.f32 %v518, %v522
    %v525 = vsel %vm350, %v523, 0
    %527 = vmatprep.subr.mxu0 %v335
    %528 = vmatpush1.msra.mxu0 %v334
    %529 = vmatprep.subr.mxu0 %v339
    %530 = vmatpush1.msra.mxu0 %v338
    %531 = vmatprep.subr.mxu0 %v343
    %532 = vmatpush1.msra.mxu0 %v342
    %533 = vmatprep.subr.mxu0 %v347
    %534 = vmatpush1.msra.mxu0 %v346
    %535 = vmatprep.subr.mxu0 0.0
    %536 = vmatpush1.msra.mxu0 0.0
    %537 = vmatprep.subr.mxu0 0.0
    %538 = vmatpush1.msra.mxu0 0.0
    %539 = vmatprep.subr.mxu0 0.0
    %540 = vmatpush1.msra.mxu0 0.0
    %541 = vmatprep.subr.mxu0 0.0
    %542 = vmatpush1.msra.mxu0 0.0
    %543 = vmatprep.subr.mxu0 0.0
    %544 = vmatpush1.msra.mxu0 0.0
    %545 = vmatprep.subr.mxu0 0.0
    %546 = vmatpush1.msra.mxu0 0.0
    %547 = vmatprep.subr.mxu0 0.0
    %548 = vmatpush1.msra.mxu0 0.0
    %549 = vmatprep.subr.mxu0 0.0
    %550 = vmatpush1.msra.mxu0 0.0
    %551 = vmatprep.subr.mxu0 0.0
    %552 = vmatpush1.msra.mxu0 0.0
    %553 = vmatprep.subr.mxu0 0.0
    %554 = vmatpush1.msra.mxu0 0.0
    %555 = vmatprep.subr.mxu0 0.0
    %556 = vmatpush1.msra.mxu0 0.0
    %557 = vmatprep.subr.mxu0 0.0
    %558 = vmatpush1.msra.mxu0 0.0
    %559 = vmatprep.subr.mxu0 0.0
    %560 = vmatpush1.msra.mxu0 0.0
    %561 = vmatprep.subr.mxu0 0.0
    %562 = vmatpush1.msra.mxu0 0.0
    %563 = vmatprep.subr.mxu0 0.0
    %564 = vmatpush1.msra.mxu0 0.0
    %565 = vmatprep.subr.mxu0 0.0
    %566 = vmatpush1.msra.mxu0 0.0
    %567 = vmatprep.subr.mxu0 0.0
    %568 = vmatpush1.msra.mxu0 0.0
    %569 = vmatprep.subr.mxu0 0.0
    %570 = vmatpush1.msra.mxu0 0.0
    %571 = vmatprep.subr.mxu0 0.0
    %572 = vmatpush1.msra.mxu0 0.0
    %573 = vmatprep.subr.mxu0 0.0
    %574 = vmatpush1.msra.mxu0 0.0
    %575 = vmatprep.subr.mxu0 0.0
    %576 = vmatpush1.msra.mxu0 0.0
    %577 = vmatprep.subr.mxu0 0.0
    %578 = vmatpush1.msra.mxu0 0.0
    %579 = vmatprep.subr.mxu0 0.0
    %580 = vmatpush1.msra.mxu0 0.0
    %581 = vmatprep.subr.mxu0 0.0
    %582 = vmatpush1.msra.mxu0 0.0
    %583 = vmatprep.subr.mxu0 0.0
    %584 = vmatpush1.msra.mxu0 0.0
    %585 = vmatprep.subr.mxu0 0.0
    %586 = vmatpush1.msra.mxu0 0.0
    %587 = vmatprep.subr.mxu0 0.0
    %588 = vmatpush1.msra.mxu0 0.0
    %589 = vmatprep.subr.mxu0 0.0
    %590 = vmatpush1.msra.mxu0 0.0
    %591 = vmatprep.mubr.f32.mxu0 0.0
    %592 = vmatmul.mubr.f32.gmra.mrb[0].mxu0 %v525
    %v593 = vpop.f32.mrb[0].mxu0
    %v594 = vadd.f32 0.0, %v593
    %v595 = vpop.f32.mrb[0].mxu0
    %v596 = vadd.f32 0.0, %v595
    %597 = vdwg.mxu0
    %598 = vmatprep.subr.mxu0 %v337
    %599 = vmatpush1.msra.mxu0 %v336
    %600 = vmatprep.subr.mxu0 %v341
    %601 = vmatpush1.msra.mxu0 %v340
    %602 = vmatprep.subr.mxu0 %v345
    %603 = vmatpush1.msra.mxu0 %v344
    %604 = vmatprep.subr.mxu0 %v349
    %605 = vmatpush1.msra.mxu0 %v348
    %606 = vmatprep.subr.mxu0 0.0
    %607 = vmatpush1.msra.mxu0 0.0
    %608 = vmatprep.subr.mxu0 0.0
    %609 = vmatpush1.msra.mxu0 0.0
    %610 = vmatprep.subr.mxu0 0.0
    %611 = vmatpush1.msra.mxu0 0.0
    %612 = vmatprep.subr.mxu0 0.0
    %613 = vmatpush1.msra.mxu0 0.0
    %614 = vmatprep.subr.mxu0 0.0
    %615 = vmatpush1.msra.mxu0 0.0
    %616 = vmatprep.subr.mxu0 0.0
    %617 = vmatpush1.msra.mxu0 0.0
    %618 = vmatprep.subr.mxu0 0.0
    %619 = vmatpush1.msra.mxu0 0.0
    %620 = vmatprep.subr.mxu0 0.0
    %621 = vmatpush1.msra.mxu0 0.0
    %622 = vmatprep.subr.mxu0 0.0
    %623 = vmatpush1.msra.mxu0 0.0
    %624 = vmatprep.subr.mxu0 0.0
    %625 = vmatpush1.msra.mxu0 0.0
    %626 = vmatprep.subr.mxu0 0.0
    %627 = vmatpush1.msra.mxu0 0.0
    %628 = vmatprep.subr.mxu0 0.0
    %629 = vmatpush1.msra.mxu0 0.0
    %630 = vmatprep.subr.mxu0 0.0
    %631 = vmatpush1.msra.mxu0 0.0
    %632 = vmatprep.subr.mxu0 0.0
    %633 = vmatpush1.msra.mxu0 0.0
    %634 = vmatprep.subr.mxu0 0.0
    %635 = vmatpush1.msra.mxu0 0.0
    %636 = vmatprep.subr.mxu0 0.0
    %637 = vmatpush1.msra.mxu0 0.0
    %638 = vmatprep.subr.mxu0 0.0
    %639 = vmatpush1.msra.mxu0 0.0
    %640 = vmatprep.subr.mxu0 0.0
    %641 = vmatpush1.msra.mxu0 0.0
    %642 = vmatprep.subr.mxu0 0.0
    %643 = vmatpush1.msra.mxu0 0.0
    %644 = vmatprep.subr.mxu0 0.0
    %645 = vmatpush1.msra.mxu0 0.0
    %646 = vmatprep.subr.mxu0 0.0
    %647 = vmatpush1.msra.mxu0 0.0
    %648 = vmatprep.subr.mxu0 0.0
    %649 = vmatpush1.msra.mxu0 0.0
    %650 = vmatprep.subr.mxu0 0.0
    %651 = vmatpush1.msra.mxu0 0.0
    %652 = vmatprep.subr.mxu0 0.0
    %653 = vmatpush1.msra.mxu0 0.0
    %654 = vmatprep.subr.mxu0 0.0
    %655 = vmatpush1.msra.mxu0 0.0
    %656 = vmatprep.subr.mxu0 0.0
    %657 = vmatpush1.msra.mxu0 0.0
    %658 = vmatprep.subr.mxu0 0.0
    %659 = vmatpush1.msra.mxu0 0.0
    %660 = vmatprep.subr.mxu0 0.0
    %661 = vmatpush1.msra.mxu0 0.0
    %662 = vmatprep.mubr.f32.mxu0 0.0
    %663 = vmatmul.mubr.f32.gmra.mrb[0].mxu0 %v525
    %v664 = vpop.f32.mrb[0].mxu0
    %v665 = vadd.f32 0.0, %v664
    %v666 = vpop.f32.mrb[0].mxu0
    %v667 = vadd.f32 0.0, %v666
    %668 = vdwg.mxu0
    %v669 = vadd.f32 %v181, %v594
    %v670 = vadd.f32 %v183, %v596
    %v671 = vadd.f32 %v294, %v665
    %v672 = vadd.f32 %v296, %v667
    %v673 = vxor.u32 %v669, 2147483648
    %v674 = vmul.f32 %v673, 1.442695
    %v675 = vpow.pop %v674
    %v676 = vadd.f32 %v675, 1.0
    %v677 = vrcp.pop %v676
    %v678 = vmul.f32 1.0, %v677
    %v679 = vxor.u32 %v670, 2147483648
    %v680 = vmul.f32 %v679, 1.442695
    %v681 = vpow.pop %v680
    %v682 = vadd.f32 %v681, 1.0
    %v683 = vrcp.pop %v682
    %v684 = vmul.f32 1.0, %v683
    %v685 = vtanh.pop %v671
    %v686 = vxor.u32 %v672, 2147483648
    %v687 = vmul.f32 %v686, 1.442695
    %v688 = vpow.pop %v687
    %v689 = vadd.f32 %v688, 1.0
    %v690 = vrcp.pop %v689
    %v691 = vmul.f32 1.0, %v690
    %v692 = vmul.f32 %v684, %v521
    %v693 = vmul.f32 %v678, %v685
    %v694 = vadd.f32 %v692, %v693
    %v695 = vtanh.pop %v694
    %v696 = vmul.f32 %v691, %v695
    %v698 = vsel %vm350, %v696, 0
    %700 = vmatprep.subr.mxu0 %v335
    %701 = vmatpush1.msra.mxu0 %v334
    %702 = vmatprep.subr.mxu0 %v339
    %703 = vmatpush1.msra.mxu0 %v338
    %704 = vmatprep.subr.mxu0 %v343
    %705 = vmatpush1.msra.mxu0 %v342
    %706 = vmatprep.subr.mxu0 %v347
    %707 = vmatpush1.msra.mxu0 %v346
    %708 = vmatprep.subr.mxu0 0.0
    %709 = vmatpush1.msra.mxu0 0.0
    %710 = vmatprep.subr.mxu0 0.0
    %711 = vmatpush1.msra.mxu0 0.0
    %712 = vmatprep.subr.mxu0 0.0
    %713 = vmatpush1.msra.mxu0 0.0
    %714 = vmatprep.subr.mxu0 0.0
    %715 = vmatpush1.msra.mxu0 0.0
    %716 = vmatprep.subr.mxu0 0.0
    %717 = vmatpush1.msra.mxu0 0.0
    %718 = vmatprep.subr.mxu0 0.0
    %719 = vmatpush1.msra.mxu0 0.0
    %720 = vmatprep.subr.mxu0 0.0
    %721 = vmatpush1.msra.mxu0 0.0
    %722 = vmatprep.subr.mxu0 0.0
    %723 = vmatpush1.msra.mxu0 0.0
    %724 = vmatprep.subr.mxu0 0.0
    %725 = vmatpush1.msra.mxu0 0.0
    %726 = vmatprep.subr.mxu0 0.0
    %727 = vmatpush1.msra.mxu0 0.0
    %728 = vmatprep.subr.mxu0 0.0
    %729 = vmatpush1.msra.mxu0 0.0
    %730 = vmatprep.subr.mxu0 0.0
    %731 = vmatpush1.msra.mxu0 0.0
    %732 = vmatprep.subr.mxu0 0.0
    %733 = vmatpush1.msra.mxu0 0.0
    %734 = vmatprep.subr.mxu0 0.0
    %735 = vmatpush1.msra.mxu0 0.0
    %736 = vmatprep.subr.mxu0 0.0
    %737 = vmatpush1.msra.mxu0 0.0
    %738 = vmatprep.subr.mxu0 0.0
    %739 = vmatpush1.msra.mxu0 0.0
    %740 = vmatprep.subr.mxu0 0.0
    %741 = vmatpush1.msra.mxu0 0.0
    %742 = vmatprep.subr.mxu0 0.0
    %743 = vmatpush1.msra.mxu0 0.0
    %744 = vmatprep.subr.mxu0 0.0
    %745 = vmatpush1.msra.mxu0 0.0
    %746 = vmatprep.subr.mxu0 0.0
    %747 = vmatpush1.msra.mxu0 0.0
    %748 = vmatprep.subr.mxu0 0.0
    %749 = vmatpush1.msra.mxu0 0.0
    %750 = vmatprep.subr.mxu0 0.0
    %751 = vmatpush1.msra.mxu0 0.0
    %752 = vmatprep.subr.mxu0 0.0
    %753 = vmatpush1.msra.mxu0 0.0
    %754 = vmatprep.subr.mxu0 0.0
    %755 = vmatpush1.msra.mxu0 0.0
    %756 = vmatprep.subr.mxu0 0.0
    %757 = vmatpush1.msra.mxu0 0.0
    %758 = vmatprep.subr.mxu0 0.0
    %759 = vmatpush1.msra.mxu0 0.0
    %760 = vmatprep.subr.mxu0 0.0
    %761 = vmatpush1.msra.mxu0 0.0
    %762 = vmatprep.subr.mxu0 0.0
    %763 = vmatpush1.msra.mxu0 0.0
    %764 = vmatprep.mubr.f32.mxu0 0.0
    %765 = vmatmul.mubr.f32.gmra.mrb[0].mxu0 %v698
    %v766 = vpop.f32.mrb[0].mxu0
    %v767 = vadd.f32 0.0, %v766
    %v768 = vpop.f32.mrb[0].mxu0
    %v769 = vadd.f32 0.0, %v768
    %770 = vdwg.mxu0
    %771 = vmatprep.subr.mxu0 %v337
    %772 = vmatpush1.msra.mxu0 %v336
    %773 = vmatprep.subr.mxu0 %v341
    %774 = vmatpush1.msra.mxu0 %v340
    %775 = vmatprep.subr.mxu0 %v345
    %776 = vmatpush1.msra.mxu0 %v344
    %777 = vmatprep.subr.mxu0 %v349
    %778 = vmatpush1.msra.mxu0 %v348
    %779 = vmatprep.subr.mxu0 0.0
    %780 = vmatpush1.msra.mxu0 0.0
    %781 = vmatprep.subr.mxu0 0.0
    %782 = vmatpush1.msra.mxu0 0.0
    %783 = vmatprep.subr.mxu0 0.0
    %784 = vmatpush1.msra.mxu0 0.0
    %785 = vmatprep.subr.mxu0 0.0
    %786 = vmatpush1.msra.mxu0 0.0
    %787 = vmatprep.subr.mxu0 0.0
    %788 = vmatpush1.msra.mxu0 0.0
    %789 = vmatprep.subr.mxu0 0.0
    %790 = vmatpush1.msra.mxu0 0.0
    %791 = vmatprep.subr.mxu0 0.0
    %792 = vmatpush1.msra.mxu0 0.0
    %793 = vmatprep.subr.mxu0 0.0
    %794 = vmatpush1.msra.mxu0 0.0
    %795 = vmatprep.subr.mxu0 0.0
    %796 = vmatpush1.msra.mxu0 0.0
    %797 = vmatprep.subr.mxu0 0.0
    %798 = vmatpush1.msra.mxu0 0.0
    %799 = vmatprep.subr.mxu0 0.0
    %800 = vmatpush1.msra.mxu0 0.0
    %801 = vmatprep.subr.mxu0 0.0
    %802 = vmatpush1.msra.mxu0 0.0
    %803 = vmatprep.subr.mxu0 0.0
    %804 = vmatpush1.msra.mxu0 0.0
    %805 = vmatprep.subr.mxu0 0.0
    %806 = vmatpush1.msra.mxu0 0.0
    %807 = vmatprep.subr.mxu0 0.0
    %808 = vmatpush1.msra.mxu0 0.0
    %809 = vmatprep.subr.mxu0 0.0
    %810 = vmatpush1.msra.mxu0 0.0
    %811 = vmatprep.subr.mxu0 0.0
    %812 = vmatpush1.msra.mxu0 0.0
    %813 = vmatprep.subr.mxu0 0.0
    %814 = vmatpush1.msra.mxu0 0.0
    %815 = vmatprep.subr.mxu0 0.0
    %816 = vmatpush1.msra.mxu0 0.0
    %817 = vmatprep.subr.mxu0 0.0
    %818 = vmatpush1.msra.mxu0 0.0
    %819 = vmatprep.subr.mxu0 0.0
    %820 = vmatpush1.msra.mxu0 0.0
    %821 = vmatprep.subr.mxu0 0.0
    %822 = vmatpush1.msra.mxu0 0.0
    %823 = vmatprep.subr.mxu0 0.0
    %824 = vmatpush1.msra.mxu0 0.0
    %825 = vmatprep.subr.mxu0 0.0
    %826 = vmatpush1.msra.mxu0 0.0
    %827 = vmatprep.subr.mxu0 0.0
    %828 = vmatpush1.msra.mxu0 0.0
    %829 = vmatprep.subr.mxu0 0.0
    %830 = vmatpush1.msra.mxu0 0.0
    %831 = vmatprep.subr.mxu0 0.0
    %832 = vmatpush1.msra.mxu0 0.0
    %833 = vmatprep.subr.mxu0 0.0
    %834 = vmatpush1.msra.mxu0 0.0
    %835 = vmatprep.mubr.f32.mxu0 0.0
    %836 = vmatmul.mubr.f32.gmra.mrb[0].mxu0 %v698
    %v837 = vpop.f32.mrb[0].mxu0
    %v838 = vadd.f32 0.0, %v837
    %v839 = vpop.f32.mrb[0].mxu0
    %v840 = vadd.f32 0.0, %v839
    %841 = vdwg.mxu0
    %v842 = vadd.f32 %v187, %v767
    %v843 = vadd.f32 %v189, %v769
    %v844 = vadd.f32 %v300, %v838
    %v845 = vadd.f32 %v302, %v840
    %v846 = vxor.u32 %v842, 2147483648
    %v847 = vmul.f32 %v846, 1.442695
    %v848 = vpow.pop %v847
    %v849 = vadd.f32 %v848, 1.0
    %v850 = vrcp.pop %v849
    %v851 = vmul.f32 1.0, %v850
    %v852 = vxor.u32 %v843, 2147483648
    %v853 = vmul.f32 %v852, 1.442695
    %v854 = vpow.pop %v853
    %v855 = vadd.f32 %v854, 1.0
    %v856 = vrcp.pop %v855
    %v857 = vmul.f32 1.0, %v856
    %v858 = vtanh.pop %v844
    %v859 = vxor.u32 %v845, 2147483648
    %v860 = vmul.f32 %v859, 1.442695
    %v861 = vpow.pop %v860
    %v862 = vadd.f32 %v861, 1.0
    %v863 = vrcp.pop %v862
    %v864 = vmul.f32 1.0, %v863
    %v865 = vmul.f32 %v857, %v694
    %v866 = vmul.f32 %v851, %v858
    %v867 = vadd.f32 %v865, %v866
    %v868 = vtanh.pop %v867
    %v869 = vmul.f32 %v864, %v868
    %v871 = vsel %vm350, %v869, 0
    %873 = vmatprep.subr.mxu0 %v335
    %874 = vmatpush1.msra.mxu0 %v334
    %875 = vmatprep.subr.mxu0 %v339
    %876 = vmatpush1.msra.mxu0 %v338
    %877 = vmatprep.subr.mxu0 %v343
    %878 = vmatpush1.msra.mxu0 %v342
    %879 = vmatprep.subr.mxu0 %v347
    %880 = vmatpush1.msra.mxu0 %v346
    %881 = vmatprep.subr.mxu0 0.0
    %882 = vmatpush1.msra.mxu0 0.0
    %883 = vmatprep.subr.mxu0 0.0
    %884 = vmatpush1.msra.mxu0 0.0
    %885 = vmatprep.subr.mxu0 0.0
    %886 = vmatpush1.msra.mxu0 0.0
    %887 = vmatprep.subr.mxu0 0.0
    %888 = vmatpush1.msra.mxu0 0.0
    %889 = vmatprep.subr.mxu0 0.0
    %890 = vmatpush1.msra.mxu0 0.0
    %891 = vmatprep.subr.mxu0 0.0
    %892 = vmatpush1.msra.mxu0 0.0
    %893 = vmatprep.subr.mxu0 0.0
    %894 = vmatpush1.msra.mxu0 0.0
    %895 = vmatprep.subr.mxu0 0.0
    %896 = vmatpush1.msra.mxu0 0.0
    %897 = vmatprep.subr.mxu0 0.0
    %898 = vmatpush1.msra.mxu0 0.0
    %899 = vmatprep.subr.mxu0 0.0
    %900 = vmatpush1.msra.mxu0 0.0
    %901 = vmatprep.subr.mxu0 0.0
    %902 = vmatpush1.msra.mxu0 0.0
    %903 = vmatprep.subr.mxu0 0.0
    %904 = vmatpush1.msra.mxu0 0.0
    %905 = vmatprep.subr.mxu0 0.0
    %906 = vmatpush1.msra.mxu0 0.0
    %907 = vmatprep.subr.mxu0 0.0
    %908 = vmatpush1.msra.mxu0 0.0
    %909 = vmatprep.subr.mxu0 0.0
    %910 = vmatpush1.msra.mxu0 0.0
    %911 = vmatprep.subr.mxu0 0.0
    %912 = vmatpush1.msra.mxu0 0.0
    %913 = vmatprep.subr.mxu0 0.0
    %914 = vmatpush1.msra.mxu0 0.0
    %915 = vmatprep.subr.mxu0 0.0
    %916 = vmatpush1.msra.mxu0 0.0
    %917 = vmatprep.subr.mxu0 0.0
    %918 = vmatpush1.msra.mxu0 0.0
    %919 = vmatprep.subr.mxu0 0.0
    %920 = vmatpush1.msra.mxu0 0.0
    %921 = vmatprep.subr.mxu0 0.0
    %922 = vmatpush1.msra.mxu0 0.0
    %923 = vmatprep.subr.mxu0 0.0
    %924 = vmatpush1.msra.mxu0 0.0
    %925 = vmatprep.subr.mxu0 0.0
    %926 = vmatpush1.msra.mxu0 0.0
    %927 = vmatprep.subr.mxu0 0.0
    %928 = vmatpush1.msra.mxu0 0.0
    %929 = vmatprep.subr.mxu0 0.0
    %930 = vmatpush1.msra.mxu0 0.0
    %931 = vmatprep.subr.mxu0 0.0
    %932 = vmatpush1.msra.mxu0 0.0
    %933 = vmatprep.subr.mxu0 0.0
    %934 = vmatpush1.msra.mxu0 0.0
    %935 = vmatprep.subr.mxu0 0.0
    %936 = vmatpush1.msra.mxu0 0.0
    %937 = vmatprep.mubr.f32.mxu0 0.0
    %938 = vmatmul.mubr.f32.gmra.mrb[0].mxu0 %v871
    %v939 = vpop.f32.mrb[0].mxu0
    %v940 = vadd.f32 0.0, %v939
    %v941 = vpop.f32.mrb[0].mxu0
    %v942 = vadd.f32 0.0, %v941
    %943 = vdwg.mxu0
    %944 = vmatprep.subr.mxu0 %v337
    %945 = vmatpush1.msra.mxu0 %v336
    %946 = vmatprep.subr.mxu0 %v341
    %947 = vmatpush1.msra.mxu0 %v340
    %948 = vmatprep.subr.mxu0 %v345
    %949 = vmatpush1.msra.mxu0 %v344
    %950 = vmatprep.subr.mxu0 %v349
    %951 = vmatpush1.msra.mxu0 %v348
    %952 = vmatprep.subr.mxu0 0.0
    %953 = vmatpush1.msra.mxu0 0.0
    %954 = vmatprep.subr.mxu0 0.0
    %955 = vmatpush1.msra.mxu0 0.0
    %956 = vmatprep.subr.mxu0 0.0
    %957 = vmatpush1.msra.mxu0 0.0
    %958 = vmatprep.subr.mxu0 0.0
    %959 = vmatpush1.msra.mxu0 0.0
    %960 = vmatprep.subr.mxu0 0.0
    %961 = vmatpush1.msra.mxu0 0.0
    %962 = vmatprep.subr.mxu0 0.0
    %963 = vmatpush1.msra.mxu0 0.0
    %964 = vmatprep.subr.mxu0 0.0
    %965 = vmatpush1.msra.mxu0 0.0
    %966 = vmatprep.subr.mxu0 0.0
    %967 = vmatpush1.msra.mxu0 0.0
    %968 = vmatprep.subr.mxu0 0.0
    %969 = vmatpush1.msra.mxu0 0.0
    %970 = vmatprep.subr.mxu0 0.0
    %971 = vmatpush1.msra.mxu0 0.0
    %972 = vmatprep.subr.mxu0 0.0
    %973 = vmatpush1.msra.mxu0 0.0
    %974 = vmatprep.subr.mxu0 0.0
    %975 = vmatpush1.msra.mxu0 0.0
    %976 = vmatprep.subr.mxu0 0.0
    %977 = vmatpush1.msra.mxu0 0.0
    %978 = vmatprep.subr.mxu0 0.0
    %979 = vmatpush1.msra.mxu0 0.0
    %980 = vmatprep.subr.mxu0 0.0
    %981 = vmatpush1.msra.mxu0 0.0
    %982 = vmatprep.subr.mxu0 0.0
    %983 = vmatpush1.msra.mxu0 0.0
    %984 = vmatprep.subr.mxu0 0.0
    %985 = vmatpush1.msra.mxu0 0.0
    %986 = vmatprep.subr.mxu0 0.0
    %987 = vmatpush1.msra.mxu0 0.0
    %988 = vmatprep.subr.mxu0 0.0
    %989 = vmatpush1.msra.mxu0 0.0
    %990 = vmatprep.subr.mxu0 0.0
    %991 = vmatpush1.msra.mxu0 0.0
    %992 = vmatprep.subr.mxu0 0.0
    %993 = vmatpush1.msra.mxu0 0.0
    %994 = vmatprep.subr.mxu0 0.0
    %995 = vmatpush1.msra.mxu0 0.0
    %996 = vmatprep.subr.mxu0 0.0
    %997 = vmatpush1.msra.mxu0 0.0
    %998 = vmatprep.subr.mxu0 0.0
    %999 = vmatpush1.msra.mxu0 0.0
    %1000 = vmatprep.subr.mxu0 0.0
    %1001 = vmatpush1.msra.mxu0 0.0
    %1002 = vmatprep.subr.mxu0 0.0
    %1003 = vmatpush1.msra.mxu0 0.0
    %1004 = vmatprep.subr.mxu0 0.0
    %1005 = vmatpush1.msra.mxu0 0.0
    %1006 = vmatprep.subr.mxu0 0.0
    %1007 = vmatpush1.msra.mxu0 0.0
    %1008 = vmatprep.mubr.f32.mxu0 0.0
    %1009 = vmatmul.mubr.f32.gmra.mrb[0].mxu0 %v871
    %v1010 = vpop.f32.mrb[0].mxu0
    %v1011 = vadd.f32 0.0, %v1010
    %v1012 = vpop.f32.mrb[0].mxu0
    %v1013 = vadd.f32 0.0, %v1012
    %1014 = vdwg.mxu0
    %v1015 = vadd.f32 %v193, %v940
    %v1016 = vadd.f32 %v195, %v942
    %v1017 = vadd.f32 %v306, %v1011
    %v1018 = vadd.f32 %v308, %v1013
    %v1019 = vxor.u32 %v1015, 2147483648
    %v1020 = vmul.f32 %v1019, 1.442695
    %v1021 = vpow.pop %v1020
    %v1022 = vadd.f32 %v1021, 1.0
    %v1023 = vrcp.pop %v1022
    %v1024 = vmul.f32 1.0, %v1023
    %v1025 = vxor.u32 %v1016, 2147483648
    %v1026 = vmul.f32 %v1025, 1.442695
    %v1027 = vpow.pop %v1026
    %v1028 = vadd.f32 %v1027, 1.0
    %v1029 = vrcp.pop %v1028
    %v1030 = vmul.f32 1.0, %v1029
    %v1031 = vtanh.pop %v1017
    %v1032 = vxor.u32 %v1018, 2147483648
    %v1033 = vmul.f32 %v1032, 1.442695
    %v1034 = vpow.pop %v1033
    %v1035 = vadd.f32 %v1034, 1.0
    %v1036 = vrcp.pop %v1035
    %v1037 = vmul.f32 1.0, %v1036
    %v1038 = vmul.f32 %v1030, %v867
    %v1039 = vmul.f32 %v1024, %v1031
    %v1040 = vadd.f32 %v1038, %v1039
    %v1041 = vtanh.pop %v1040
    %v1042 = vmul.f32 %v1037, %v1041
    %v1044 = vsel %vm350, %v1042, 0
    %1046 = vmatprep.subr.mxu0 %v335
    %1047 = vmatpush1.msra.mxu0 %v334
    %1048 = vmatprep.subr.mxu0 %v339
    %1049 = vmatpush1.msra.mxu0 %v338
    %1050 = vmatprep.subr.mxu0 %v343
    %1051 = vmatpush1.msra.mxu0 %v342
    %1052 = vmatprep.subr.mxu0 %v347
    %1053 = vmatpush1.msra.mxu0 %v346
    %1054 = vmatprep.subr.mxu0 0.0
    %1055 = vmatpush1.msra.mxu0 0.0
    %1056 = vmatprep.subr.mxu0 0.0
    %1057 = vmatpush1.msra.mxu0 0.0
    %1058 = vmatprep.subr.mxu0 0.0
    %1059 = vmatpush1.msra.mxu0 0.0
    %1060 = vmatprep.subr.mxu0 0.0
    %1061 = vmatpush1.msra.mxu0 0.0
    %1062 = vmatprep.subr.mxu0 0.0
    %1063 = vmatpush1.msra.mxu0 0.0
    %1064 = vmatprep.subr.mxu0 0.0
    %1065 = vmatpush1.msra.mxu0 0.0
    %1066 = vmatprep.subr.mxu0 0.0
    %1067 = vmatpush1.msra.mxu0 0.0
    %1068 = vmatprep.subr.mxu0 0.0
    %1069 = vmatpush1.msra.mxu0 0.0
    %1070 = vmatprep.subr.mxu0 0.0
    %1071 = vmatpush1.msra.mxu0 0.0
    %1072 = vmatprep.subr.mxu0 0.0
    %1073 = vmatpush1.msra.mxu0 0.0
    %1074 = vmatprep.subr.mxu0 0.0
    %1075 = vmatpush1.msra.mxu0 0.0
    %1076 = vmatprep.subr.mxu0 0.0
    %1077 = vmatpush1.msra.mxu0 0.0
    %1078 = vmatprep.subr.mxu0 0.0
    %1079 = vmatpush1.msra.mxu0 0.0
    %1080 = vmatprep.subr.mxu0 0.0
    %1081 = vmatpush1.msra.mxu0 0.0
    %1082 = vmatprep.subr.mxu0 0.0
    %1083 = vmatpush1.msra.mxu0 0.0
    %1084 = vmatprep.subr.mxu0 0.0
    %1085 = vmatpush1.msra.mxu0 0.0
    %1086 = vmatprep.subr.mxu0 0.0
    %1087 = vmatpush1.msra.mxu0 0.0
    %1088 = vmatprep.subr.mxu0 0.0
    %1089 = vmatpush1.msra.mxu0 0.0
    %1090 = vmatprep.subr.mxu0 0.0
    %1091 = vmatpush1.msra.mxu0 0.0
    %1092 = vmatprep.subr.mxu0 0.0
    %1093 = vmatpush1.msra.mxu0 0.0
    %1094 = vmatprep.subr.mxu0 0.0
    %1095 = vmatpush1.msra.mxu0 0.0
    %1096 = vmatprep.subr.mxu0 0.0
    %1097 = vmatpush1.msra.mxu0 0.0
    %1098 = vmatprep.subr.mxu0 0.0
    %1099 = vmatpush1.msra.mxu0 0.0
    %1100 = vmatprep.subr.mxu0 0.0
    %1101 = vmatpush1.msra.mxu0 0.0
    %1102 = vmatprep.subr.mxu0 0.0
    %1103 = vmatpush1.msra.mxu0 0.0
    %1104 = vmatprep.subr.mxu0 0.0
    %1105 = vmatpush1.msra.mxu0 0.0
    %1106 = vmatprep.subr.mxu0 0.0
    %1107 = vmatpush1.msra.mxu0 0.0
    %1108 = vmatprep.subr.mxu0 0.0
    %1109 = vmatpush1.msra.mxu0 0.0
    %1110 = vmatprep.mubr.f32.mxu0 0.0
    %1111 = vmatmul.mubr.f32.gmra.mrb[0].mxu0 %v1044
    %v1112 = vpop.f32.mrb[0].mxu0
    %v1113 = vadd.f32 0.0, %v1112
    %v1114 = vpop.f32.mrb[0].mxu0
    %v1115 = vadd.f32 0.0, %v1114
    %1116 = vdwg.mxu0
    %1117 = vmatprep.subr.mxu0 %v337
    %1118 = vmatpush1.msra.mxu0 %v336
    %1119 = vmatprep.subr.mxu0 %v341
    %1120 = vmatpush1.msra.mxu0 %v340
    %1121 = vmatprep.subr.mxu0 %v345
    %1122 = vmatpush1.msra.mxu0 %v344
    %1123 = vmatprep.subr.mxu0 %v349
    %1124 = vmatpush1.msra.mxu0 %v348
    %1125 = vmatprep.subr.mxu0 0.0
    %1126 = vmatpush1.msra.mxu0 0.0
    %1127 = vmatprep.subr.mxu0 0.0
    %1128 = vmatpush1.msra.mxu0 0.0
    %1129 = vmatprep.subr.mxu0 0.0
    %1130 = vmatpush1.msra.mxu0 0.0
    %1131 = vmatprep.subr.mxu0 0.0
    %1132 = vmatpush1.msra.mxu0 0.0
    %1133 = vmatprep.subr.mxu0 0.0
    %1134 = vmatpush1.msra.mxu0 0.0
    %1135 = vmatprep.subr.mxu0 0.0
    %1136 = vmatpush1.msra.mxu0 0.0
    %1137 = vmatprep.subr.mxu0 0.0
    %1138 = vmatpush1.msra.mxu0 0.0
    %1139 = vmatprep.subr.mxu0 0.0
    %1140 = vmatpush1.msra.mxu0 0.0
    %1141 = vmatprep.subr.mxu0 0.0
    %1142 = vmatpush1.msra.mxu0 0.0
    %1143 = vmatprep.subr.mxu0 0.0
    %1144 = vmatpush1.msra.mxu0 0.0
    %1145 = vmatprep.subr.mxu0 0.0
    %1146 = vmatpush1.msra.mxu0 0.0
    %1147 = vmatprep.subr.mxu0 0.0
    %1148 = vmatpush1.msra.mxu0 0.0
    %1149 = vmatprep.subr.mxu0 0.0
    %1150 = vmatpush1.msra.mxu0 0.0
    %1151 = vmatprep.subr.mxu0 0.0
    %1152 = vmatpush1.msra.mxu0 0.0
    %1153 = vmatprep.subr.mxu0 0.0
    %1154 = vmatpush1.msra.mxu0 0.0
    %1155 = vmatprep.subr.mxu0 0.0
    %1156 = vmatpush1.msra.mxu0 0.0
    %1157 = vmatprep.subr.mxu0 0.0
    %1158 = vmatpush1.msra.mxu0 0.0
    %1159 = vmatprep.subr.mxu0 0.0
    %1160 = vmatpush1.msra.mxu0 0.0
    %1161 = vmatprep.subr.mxu0 0.0
    %1162 = vmatpush1.msra.mxu0 0.0
    %1163 = vmatprep.subr.mxu0 0.0
    %1164 = vmatpush1.msra.mxu0 0.0
    %1165 = vmatprep.subr.mxu0 0.0
    %1166 = vmatpush1.msra.mxu0 0.0
    %1167 = vmatprep.subr.mxu0 0.0
    %1168 = vmatpush1.msra.mxu0 0.0
    %1169 = vmatprep.subr.mxu0 0.0
    %1170 = vmatpush1.msra.mxu0 0.0
    %1171 = vmatprep.subr.mxu0 0.0
    %1172 = vmatpush1.msra.mxu0 0.0
    %1173 = vmatprep.subr.mxu0 0.0
    %1174 = vmatpush1.msra.mxu0 0.0
    %1175 = vmatprep.subr.mxu0 0.0
    %1176 = vmatpush1.msra.mxu0 0.0
    %1177 = vmatprep.subr.mxu0 0.0
    %1178 = vmatpush1.msra.mxu0 0.0
    %1179 = vmatprep.subr.mxu0 0.0
    %1180 = vmatpush1.msra.mxu0 0.0
    %1181 = vmatprep.mubr.f32.mxu0 0.0
    %1182 = vmatmul.mubr.f32.gmra.mrb[0].mxu0 %v1044
    %v1183 = vpop.f32.mrb[0].mxu0
    %v1184 = vadd.f32 0.0, %v1183
    %v1185 = vpop.f32.mrb[0].mxu0
    %v1186 = vadd.f32 0.0, %v1185
    %1187 = vdwg.mxu0
    %v1188 = vadd.f32 %v199, %v1113
    %v1189 = vadd.f32 %v201, %v1115
    %v1190 = vadd.f32 %v312, %v1184
    %v1191 = vadd.f32 %v314, %v1186
    %v1192 = vxor.u32 %v1188, 2147483648
    %v1193 = vmul.f32 %v1192, 1.442695
    %v1194 = vpow.pop %v1193
    %v1195 = vadd.f32 %v1194, 1.0
    %v1196 = vrcp.pop %v1195
    %v1197 = vmul.f32 1.0, %v1196
    %v1198 = vxor.u32 %v1189, 2147483648
    %v1199 = vmul.f32 %v1198, 1.442695
    %v1200 = vpow.pop %v1199
    %v1201 = vadd.f32 %v1200, 1.0
    %v1202 = vrcp.pop %v1201
    %v1203 = vmul.f32 1.0, %v1202
    %v1204 = vtanh.pop %v1190
    %v1205 = vxor.u32 %v1191, 2147483648
    %v1206 = vmul.f32 %v1205, 1.442695
    %v1207 = vpow.pop %v1206
    %v1208 = vadd.f32 %v1207, 1.0
    %v1209 = vrcp.pop %v1208
    %v1210 = vmul.f32 1.0, %v1209
    %v1211 = vmul.f32 %v1203, %v1040
    %v1212 = vmul.f32 %v1197, %v1204
    %v1213 = vadd.f32 %v1211, %v1212
    %v1214 = vtanh.pop %v1213
    %v1215 = vmul.f32 %v1210, %v1214
    %v1217 = vsel %vm350, %v1215, 0
    %1219 = vmatprep.subr.mxu0 %v335
    %1220 = vmatpush1.msra.mxu0 %v334
    %1221 = vmatprep.subr.mxu0 %v339
    %1222 = vmatpush1.msra.mxu0 %v338
    %1223 = vmatprep.subr.mxu0 %v343
    %1224 = vmatpush1.msra.mxu0 %v342
    %1225 = vmatprep.subr.mxu0 %v347
    %1226 = vmatpush1.msra.mxu0 %v346
    %1227 = vmatprep.subr.mxu0 0.0
    %1228 = vmatpush1.msra.mxu0 0.0
    %1229 = vmatprep.subr.mxu0 0.0
    %1230 = vmatpush1.msra.mxu0 0.0
    %1231 = vmatprep.subr.mxu0 0.0
    %1232 = vmatpush1.msra.mxu0 0.0
    %1233 = vmatprep.subr.mxu0 0.0
    %1234 = vmatpush1.msra.mxu0 0.0
    %1235 = vmatprep.subr.mxu0 0.0
    %1236 = vmatpush1.msra.mxu0 0.0
    %1237 = vmatprep.subr.mxu0 0.0
    %1238 = vmatpush1.msra.mxu0 0.0
    %1239 = vmatprep.subr.mxu0 0.0
    %1240 = vmatpush1.msra.mxu0 0.0
    %1241 = vmatprep.subr.mxu0 0.0
    %1242 = vmatpush1.msra.mxu0 0.0
    %1243 = vmatprep.subr.mxu0 0.0
    %1244 = vmatpush1.msra.mxu0 0.0
    %1245 = vmatprep.subr.mxu0 0.0
    %1246 = vmatpush1.msra.mxu0 0.0
    %1247 = vmatprep.subr.mxu0 0.0
    %1248 = vmatpush1.msra.mxu0 0.0
    %1249 = vmatprep.subr.mxu0 0.0
    %1250 = vmatpush1.msra.mxu0 0.0
    %1251 = vmatprep.subr.mxu0 0.0
    %1252 = vmatpush1.msra.mxu0 0.0
    %1253 = vmatprep.subr.mxu0 0.0
    %1254 = vmatpush1.msra.mxu0 0.0
    %1255 = vmatprep.subr.mxu0 0.0
    %1256 = vmatpush1.msra.mxu0 0.0
    %1257 = vmatprep.subr.mxu0 0.0
    %1258 = vmatpush1.msra.mxu0 0.0
    %1259 = vmatprep.subr.mxu0 0.0
    %1260 = vmatpush1.msra.mxu0 0.0
    %1261 = vmatprep.subr.mxu0 0.0
    %1262 = vmatpush1.msra.mxu0 0.0
    %1263 = vmatprep.subr.mxu0 0.0
    %1264 = vmatpush1.msra.mxu0 0.0
    %1265 = vmatprep.subr.mxu0 0.0
    %1266 = vmatpush1.msra.mxu0 0.0
    %1267 = vmatprep.subr.mxu0 0.0
    %1268 = vmatpush1.msra.mxu0 0.0
    %1269 = vmatprep.subr.mxu0 0.0
    %1270 = vmatpush1.msra.mxu0 0.0
    %1271 = vmatprep.subr.mxu0 0.0
    %1272 = vmatpush1.msra.mxu0 0.0
    %1273 = vmatprep.subr.mxu0 0.0
    %1274 = vmatpush1.msra.mxu0 0.0
    %1275 = vmatprep.subr.mxu0 0.0
    %1276 = vmatpush1.msra.mxu0 0.0
    %1277 = vmatprep.subr.mxu0 0.0
    %1278 = vmatpush1.msra.mxu0 0.0
    %1279 = vmatprep.subr.mxu0 0.0
    %1280 = vmatpush1.msra.mxu0 0.0
    %1281 = vmatprep.subr.mxu0 0.0
    %1282 = vmatpush1.msra.mxu0 0.0
    %1283 = vmatprep.mubr.f32.mxu0 0.0
    %1284 = vmatmul.mubr.f32.gmra.mrb[0].mxu0 %v1217
    %v1285 = vpop.f32.mrb[0].mxu0
    %v1286 = vadd.f32 0.0, %v1285
    %v1287 = vpop.f32.mrb[0].mxu0
    %v1288 = vadd.f32 0.0, %v1287
    %1289 = vdwg.mxu0
    %1290 = vmatprep.subr.mxu0 %v337
    %1291 = vmatpush1.msra.mxu0 %v336
    %1292 = vmatprep.subr.mxu0 %v341
    %1293 = vmatpush1.msra.mxu0 %v340
    %1294 = vmatprep.subr.mxu0 %v345
    %1295 = vmatpush1.msra.mxu0 %v344
    %1296 = vmatprep.subr.mxu0 %v349
    %1297 = vmatpush1.msra.mxu0 %v348
    %1298 = vmatprep.subr.mxu0 0.0
    %1299 = vmatpush1.msra.mxu0 0.0
    %1300 = vmatprep.subr.mxu0 0.0
    %1301 = vmatpush1.msra.mxu0 0.0
    %1302 = vmatprep.subr.mxu0 0.0
    %1303 = vmatpush1.msra.mxu0 0.0
    %1304 = vmatprep.subr.mxu0 0.0
    %1305 = vmatpush1.msra.mxu0 0.0
    %1306 = vmatprep.subr.mxu0 0.0
    %1307 = vmatpush1.msra.mxu0 0.0
    %1308 = vmatprep.subr.mxu0 0.0
    %1309 = vmatpush1.msra.mxu0 0.0
    %1310 = vmatprep.subr.mxu0 0.0
    %1311 = vmatpush1.msra.mxu0 0.0
    %1312 = vmatprep.subr.mxu0 0.0
    %1313 = vmatpush1.msra.mxu0 0.0
    %1314 = vmatprep.subr.mxu0 0.0
    %1315 = vmatpush1.msra.mxu0 0.0
    %1316 = vmatprep.subr.mxu0 0.0
    %1317 = vmatpush1.msra.mxu0 0.0
    %1318 = vmatprep.subr.mxu0 0.0
    %1319 = vmatpush1.msra.mxu0 0.0
    %1320 = vmatprep.subr.mxu0 0.0
    %1321 = vmatpush1.msra.mxu0 0.0
    %1322 = vmatprep.subr.mxu0 0.0
    %1323 = vmatpush1.msra.mxu0 0.0
    %1324 = vmatprep.subr.mxu0 0.0
    %1325 = vmatpush1.msra.mxu0 0.0
    %1326 = vmatprep.subr.mxu0 0.0
    %1327 = vmatpush1.msra.mxu0 0.0
    %1328 = vmatprep.subr.mxu0 0.0
    %1329 = vmatpush1.msra.mxu0 0.0
    %1330 = vmatprep.subr.mxu0 0.0
    %1331 = vmatpush1.msra.mxu0 0.0
    %1332 = vmatprep.subr.mxu0 0.0
    %1333 = vmatpush1.msra.mxu0 0.0
    %1334 = vmatprep.subr.mxu0 0.0
    %1335 = vmatpush1.msra.mxu0 0.0
    %1336 = vmatprep.subr.mxu0 0.0
    %1337 = vmatpush1.msra.mxu0 0.0
    %1338 = vmatprep.subr.mxu0 0.0
    %1339 = vmatpush1.msra.mxu0 0.0
    %1340 = vmatprep.subr.mxu0 0.0
    %1341 = vmatpush1.msra.mxu0 0.0
    %1342 = vmatprep.subr.mxu0 0.0
    %1343 = vmatpush1.msra.mxu0 0.0
    %1344 = vmatprep.subr.mxu0 0.0
    %1345 = vmatpush1.msra.mxu0 0.0
    %1346 = vmatprep.subr.mxu0 0.0
    %1347 = vmatpush1.msra.mxu0 0.0
    %1348 = vmatprep.subr.mxu0 0.0
    %1349 = vmatpush1.msra.mxu0 0.0
    %1350 = vmatprep.subr.mxu0 0.0
    %1351 = vmatpush1.msra.mxu0 0.0
    %1352 = vmatprep.subr.mxu0 0.0
    %1353 = vmatpush1.msra.mxu0 0.0
    %1354 = vmatprep.mubr.f32.mxu0 0.0
    %1355 = vmatmul.mubr.f32.gmra.mrb[0].mxu0 %v1217
    %v1356 = vpop.f32.mrb[0].mxu0
    %v1357 = vadd.f32 0.0, %v1356
    %v1358 = vpop.f32.mrb[0].mxu0
    %v1359 = vadd.f32 0.0, %v1358
    %1360 = vdwg.mxu0
    %v1361 = vadd.f32 %v205, %v1286
    %v1362 = vadd.f32 %v207, %v1288
    %v1363 = vadd.f32 %v318, %v1357
    %v1364 = vadd.f32 %v320, %v1359
    %v1365 = vxor.u32 %v1361, 2147483648
    %v1366 = vmul.f32 %v1365, 1.442695
    %v1367 = vpow.pop %v1366
    %v1368 = vadd.f32 %v1367, 1.0
    %v1369 = vrcp.pop %v1368
    %v1370 = vmul.f32 1.0, %v1369
    %v1371 = vxor.u32 %v1362, 2147483648
    %v1372 = vmul.f32 %v1371, 1.442695
    %v1373 = vpow.pop %v1372
    %v1374 = vadd.f32 %v1373, 1.0
    %v1375 = vrcp.pop %v1374
    %v1376 = vmul.f32 1.0, %v1375
    %v1377 = vtanh.pop %v1363
    %v1378 = vxor.u32 %v1364, 2147483648
    %v1379 = vmul.f32 %v1378, 1.442695
    %v1380 = vpow.pop %v1379
    %v1381 = vadd.f32 %v1380, 1.0
    %v1382 = vrcp.pop %v1381
    %v1383 = vmul.f32 1.0, %v1382
    %v1384 = vmul.f32 %v1376, %v1213
    %v1385 = vmul.f32 %v1370, %v1377
    %v1386 = vadd.f32 %v1384, %v1385
    %v1387 = vtanh.pop %v1386
    %v1388 = vmul.f32 %v1383, %v1387
    %v1390 = vsel %vm350, %v1388, 0
    %1392 = vmatprep.subr.mxu0 %v335
    %1393 = vmatpush1.msra.mxu0 %v334
    %1394 = vmatprep.subr.mxu0 %v339
    %1395 = vmatpush1.msra.mxu0 %v338
    %1396 = vmatprep.subr.mxu0 %v343
    %1397 = vmatpush1.msra.mxu0 %v342
    %1398 = vmatprep.subr.mxu0 %v347
    %1399 = vmatpush1.msra.mxu0 %v346
    %1400 = vmatprep.subr.mxu0 0.0
    %1401 = vmatpush1.msra.mxu0 0.0
    %1402 = vmatprep.subr.mxu0 0.0
    %1403 = vmatpush1.msra.mxu0 0.0
    %1404 = vmatprep.subr.mxu0 0.0
    %1405 = vmatpush1.msra.mxu0 0.0
    %1406 = vmatprep.subr.mxu0 0.0
    %1407 = vmatpush1.msra.mxu0 0.0
    %1408 = vmatprep.subr.mxu0 0.0
    %1409 = vmatpush1.msra.mxu0 0.0
    %1410 = vmatprep.subr.mxu0 0.0
    %1411 = vmatpush1.msra.mxu0 0.0
    %1412 = vmatprep.subr.mxu0 0.0
    %1413 = vmatpush1.msra.mxu0 0.0
    %1414 = vmatprep.subr.mxu0 0.0
    %1415 = vmatpush1.msra.mxu0 0.0
    %1416 = vmatprep.subr.mxu0 0.0
    %1417 = vmatpush1.msra.mxu0 0.0
    %1418 = vmatprep.subr.mxu0 0.0
    %1419 = vmatpush1.msra.mxu0 0.0
    %1420 = vmatprep.subr.mxu0 0.0
    %1421 = vmatpush1.msra.mxu0 0.0
    %1422 = vmatprep.subr.mxu0 0.0
    %1423 = vmatpush1.msra.mxu0 0.0
    %1424 = vmatprep.subr.mxu0 0.0
    %1425 = vmatpush1.msra.mxu0 0.0
    %1426 = vmatprep.subr.mxu0 0.0
    %1427 = vmatpush1.msra.mxu0 0.0
    %1428 = vmatprep.subr.mxu0 0.0
    %1429 = vmatpush1.msra.mxu0 0.0
    %1430 = vmatprep.subr.mxu0 0.0
    %1431 = vmatpush1.msra.mxu0 0.0
    %1432 = vmatprep.subr.mxu0 0.0
    %1433 = vmatpush1.msra.mxu0 0.0
    %1434 = vmatprep.subr.mxu0 0.0
    %1435 = vmatpush1.msra.mxu0 0.0
    %1436 = vmatprep.subr.mxu0 0.0
    %1437 = vmatpush1.msra.mxu0 0.0
    %1438 = vmatprep.subr.mxu0 0.0
    %1439 = vmatpush1.msra.mxu0 0.0
    %1440 = vmatprep.subr.mxu0 0.0
    %1441 = vmatpush1.msra.mxu0 0.0
    %1442 = vmatprep.subr.mxu0 0.0
    %1443 = vmatpush1.msra.mxu0 0.0
    %1444 = vmatprep.subr.mxu0 0.0
    %1445 = vmatpush1.msra.mxu0 0.0
    %1446 = vmatprep.subr.mxu0 0.0
    %1447 = vmatpush1.msra.mxu0 0.0
    %1448 = vmatprep.subr.mxu0 0.0
    %1449 = vmatpush1.msra.mxu0 0.0
    %1450 = vmatprep.subr.mxu0 0.0
    %1451 = vmatpush1.msra.mxu0 0.0
    %1452 = vmatprep.subr.mxu0 0.0
    %1453 = vmatpush1.msra.mxu0 0.0
    %1454 = vmatprep.subr.mxu0 0.0
    %1455 = vmatpush1.msra.mxu0 0.0
    %1456 = vmatprep.mubr.f32.mxu0 0.0
    %1457 = vmatmul.mubr.f32.gmra.mrb[0].mxu0 %v1390
    %v1458 = vpop.f32.mrb[0].mxu0
    %v1459 = vadd.f32 0.0, %v1458
    %v1460 = vpop.f32.mrb[0].mxu0
    %v1461 = vadd.f32 0.0, %v1460
    %1462 = vdwg.mxu0
    %1463 = vmatprep.subr.mxu0 %v337
    %1464 = vmatpush1.msra.mxu0 %v336
    %1465 = vmatprep.subr.mxu0 %v341
    %1466 = vmatpush1.msra.mxu0 %v340
    %1467 = vmatprep.subr.mxu0 %v345
    %1468 = vmatpush1.msra.mxu0 %v344
    %1469 = vmatprep.subr.mxu0 %v349
    %1470 = vmatpush1.msra.mxu0 %v348
    %1471 = vmatprep.subr.mxu0 0.0
    %1472 = vmatpush1.msra.mxu0 0.0
    %1473 = vmatprep.subr.mxu0 0.0
    %1474 = vmatpush1.msra.mxu0 0.0
    %1475 = vmatprep.subr.mxu0 0.0
    %1476 = vmatpush1.msra.mxu0 0.0
    %1477 = vmatprep.subr.mxu0 0.0
    %1478 = vmatpush1.msra.mxu0 0.0
    %1479 = vmatprep.subr.mxu0 0.0
    %1480 = vmatpush1.msra.mxu0 0.0
    %1481 = vmatprep.subr.mxu0 0.0
    %1482 = vmatpush1.msra.mxu0 0.0
    %1483 = vmatprep.subr.mxu0 0.0
    %1484 = vmatpush1.msra.mxu0 0.0
    %1485 = vmatprep.subr.mxu0 0.0
    %1486 = vmatpush1.msra.mxu0 0.0
    %1487 = vmatprep.subr.mxu0 0.0
    %1488 = vmatpush1.msra.mxu0 0.0
    %1489 = vmatprep.subr.mxu0 0.0
    %1490 = vmatpush1.msra.mxu0 0.0
    %1491 = vmatprep.subr.mxu0 0.0
    %1492 = vmatpush1.msra.mxu0 0.0
    %1493 = vmatprep.subr.mxu0 0.0
    %1494 = vmatpush1.msra.mxu0 0.0
    %1495 = vmatprep.subr.mxu0 0.0
    %1496 = vmatpush1.msra.mxu0 0.0
    %1497 = vmatprep.subr.mxu0 0.0
    %1498 = vmatpush1.msra.mxu0 0.0
    %1499 = vmatprep.subr.mxu0 0.0
    %1500 = vmatpush1.msra.mxu0 0.0
    %1501 = vmatprep.subr.mxu0 0.0
    %1502 = vmatpush1.msra.mxu0 0.0
    %1503 = vmatprep.subr.mxu0 0.0
    %1504 = vmatpush1.msra.mxu0 0.0
    %1505 = vmatprep.subr.mxu0 0.0
    %1506 = vmatpush1.msra.mxu0 0.0
    %1507 = vmatprep.subr.mxu0 0.0
    %1508 = vmatpush1.msra.mxu0 0.0
    %1509 = vmatprep.subr.mxu0 0.0
    %1510 = vmatpush1.msra.mxu0 0.0
    %1511 = vmatprep.subr.mxu0 0.0
    %1512 = vmatpush1.msra.mxu0 0.0
    %1513 = vmatprep.subr.mxu0 0.0
    %1514 = vmatpush1.msra.mxu0 0.0
    %1515 = vmatprep.subr.mxu0 0.0
    %1516 = vmatpush1.msra.mxu0 0.0
    %1517 = vmatprep.subr.mxu0 0.0
    %1518 = vmatpush1.msra.mxu0 0.0
    %1519 = vmatprep.subr.mxu0 0.0
    %1520 = vmatpush1.msra.mxu0 0.0
    %1521 = vmatprep.subr.mxu0 0.0
    %1522 = vmatpush1.msra.mxu0 0.0
    %1523 = vmatprep.subr.mxu0 0.0
    %1524 = vmatpush1.msra.mxu0 0.0
    %1525 = vmatprep.subr.mxu0 0.0
    %1526 = vmatpush1.msra.mxu0 0.0
    %1527 = vmatprep.mubr.f32.mxu0 0.0
    %1528 = vmatmul.mubr.f32.gmra.mrb[0].mxu0 %v1390
    %v1529 = vpop.f32.mrb[0].mxu0
    %v1530 = vadd.f32 0.0, %v1529
    %v1531 = vpop.f32.mrb[0].mxu0
    %v1532 = vadd.f32 0.0, %v1531
    %1533 = vdwg.mxu0
    %v1534 = vadd.f32 %v211, %v1459
    %v1535 = vadd.f32 %v213, %v1461
    %v1536 = vadd.f32 %v324, %v1530
    %v1537 = vadd.f32 %v326, %v1532
    %v1538 = vxor.u32 %v1534, 2147483648
    %v1539 = vmul.f32 %v1538, 1.442695
    %v1540 = vpow.pop %v1539
    %v1541 = vadd.f32 %v1540, 1.0
    %v1542 = vrcp.pop %v1541
    %v1543 = vmul.f32 1.0, %v1542
    %v1544 = vxor.u32 %v1535, 2147483648
    %v1545 = vmul.f32 %v1544, 1.442695
    %v1546 = vpow.pop %v1545
    %v1547 = vadd.f32 %v1546, 1.0
    %v1548 = vrcp.pop %v1547
    %v1549 = vmul.f32 1.0, %v1548
    %v1550 = vtanh.pop %v1536
    %v1551 = vxor.u32 %v1537, 2147483648
    %v1552 = vmul.f32 %v1551, 1.442695
    %v1553 = vpow.pop %v1552
    %v1554 = vadd.f32 %v1553, 1.0
    %v1555 = vrcp.pop %v1554
    %v1556 = vmul.f32 1.0, %v1555
    %v1557 = vmul.f32 %v1549, %v1386
    %v1558 = vmul.f32 %v1543, %v1550
    %v1559 = vadd.f32 %v1557, %v1558
    %v1560 = vtanh.pop %v1559
    %v1561 = vmul.f32 %v1556, %v1560
    %v1563 = vsel %vm350, %v1561, 0
    %1565 = vmatprep.subr.mxu0 %v335
    %1566 = vmatpush1.msra.mxu0 %v334
    %1567 = vmatprep.subr.mxu0 %v339
    %1568 = vmatpush1.msra.mxu0 %v338
    %1569 = vmatprep.subr.mxu0 %v343
    %1570 = vmatpush1.msra.mxu0 %v342
    %1571 = vmatprep.subr.mxu0 %v347
    %1572 = vmatpush1.msra.mxu0 %v346
    %1573 = vmatprep.subr.mxu0 0.0
    %1574 = vmatpush1.msra.mxu0 0.0
    %1575 = vmatprep.subr.mxu0 0.0
    %1576 = vmatpush1.msra.mxu0 0.0
    %1577 = vmatprep.subr.mxu0 0.0
    %1578 = vmatpush1.msra.mxu0 0.0
    %1579 = vmatprep.subr.mxu0 0.0
    %1580 = vmatpush1.msra.mxu0 0.0
    %1581 = vmatprep.subr.mxu0 0.0
    %1582 = vmatpush1.msra.mxu0 0.0
    %1583 = vmatprep.subr.mxu0 0.0
    %1584 = vmatpush1.msra.mxu0 0.0
    %1585 = vmatprep.subr.mxu0 0.0
    %1586 = vmatpush1.msra.mxu0 0.0
    %1587 = vmatprep.subr.mxu0 0.0
    %1588 = vmatpush1.msra.mxu0 0.0
    %1589 = vmatprep.subr.mxu0 0.0
    %1590 = vmatpush1.msra.mxu0 0.0
    %1591 = vmatprep.subr.mxu0 0.0
    %1592 = vmatpush1.msra.mxu0 0.0
    %1593 = vmatprep.subr.mxu0 0.0
    %1594 = vmatpush1.msra.mxu0 0.0
    %1595 = vmatprep.subr.mxu0 0.0
    %1596 = vmatpush1.msra.mxu0 0.0
    %1597 = vmatprep.subr.mxu0 0.0
    %1598 = vmatpush1.msra.mxu0 0.0
    %1599 = vmatprep.subr.mxu0 0.0
    %1600 = vmatpush1.msra.mxu0 0.0
    %1601 = vmatprep.subr.mxu0 0.0
    %1602 = vmatpush1.msra.mxu0 0.0
    %1603 = vmatprep.subr.mxu0 0.0
    %1604 = vmatpush1.msra.mxu0 0.0
    %1605 = vmatprep.subr.mxu0 0.0
    %1606 = vmatpush1.msra.mxu0 0.0
    %1607 = vmatprep.subr.mxu0 0.0
    %1608 = vmatpush1.msra.mxu0 0.0
    %1609 = vmatprep.subr.mxu0 0.0
    %1610 = vmatpush1.msra.mxu0 0.0
    %1611 = vmatprep.subr.mxu0 0.0
    %1612 = vmatpush1.msra.mxu0 0.0
    %1613 = vmatprep.subr.mxu0 0.0
    %1614 = vmatpush1.msra.mxu0 0.0
    %1615 = vmatprep.subr.mxu0 0.0
    %1616 = vmatpush1.msra.mxu0 0.0
    %1617 = vmatprep.subr.mxu0 0.0
    %1618 = vmatpush1.msra.mxu0 0.0
    %1619 = vmatprep.subr.mxu0 0.0
    %1620 = vmatpush1.msra.mxu0 0.0
    %1621 = vmatprep.subr.mxu0 0.0
    %1622 = vmatpush1.msra.mxu0 0.0
    %1623 = vmatprep.subr.mxu0 0.0
    %1624 = vmatpush1.msra.mxu0 0.0
    %1625 = vmatprep.subr.mxu0 0.0
    %1626 = vmatpush1.msra.mxu0 0.0
    %1627 = vmatprep.subr.mxu0 0.0
    %1628 = vmatpush1.msra.mxu0 0.0
    %1629 = vmatprep.mubr.f32.mxu0 0.0
    %1630 = vmatmul.mubr.f32.gmra.mrb[0].mxu0 %v1563
    %v1631 = vpop.f32.mrb[0].mxu0
    %v1632 = vadd.f32 0.0, %v1631
    %v1633 = vpop.f32.mrb[0].mxu0
    %v1634 = vadd.f32 0.0, %v1633
    %1635 = vdwg.mxu0
    %1636 = vmatprep.subr.mxu0 %v337
    %1637 = vmatpush1.msra.mxu0 %v336
    %1638 = vmatprep.subr.mxu0 %v341
    %1639 = vmatpush1.msra.mxu0 %v340
    %1640 = vmatprep.subr.mxu0 %v345
    %1641 = vmatpush1.msra.mxu0 %v344
    %1642 = vmatprep.subr.mxu0 %v349
    %1643 = vmatpush1.msra.mxu0 %v348
    %1644 = vmatprep.subr.mxu0 0.0
    %1645 = vmatpush1.msra.mxu0 0.0
    %1646 = vmatprep.subr.mxu0 0.0
    %1647 = vmatpush1.msra.mxu0 0.0
    %1648 = vmatprep.subr.mxu0 0.0
    %1649 = vmatpush1.msra.mxu0 0.0
    %1650 = vmatprep.subr.mxu0 0.0
    %1651 = vmatpush1.msra.mxu0 0.0
    %1652 = vmatprep.subr.mxu0 0.0
    %1653 = vmatpush1.msra.mxu0 0.0
    %1654 = vmatprep.subr.mxu0 0.0
    %1655 = vmatpush1.msra.mxu0 0.0
    %1656 = vmatprep.subr.mxu0 0.0
    %1657 = vmatpush1.msra.mxu0 0.0
    %1658 = vmatprep.subr.mxu0 0.0
    %1659 = vmatpush1.msra.mxu0 0.0
    %1660 = vmatprep.subr.mxu0 0.0
    %1661 = vmatpush1.msra.mxu0 0.0
    %1662 = vmatprep.subr.mxu0 0.0
    %1663 = vmatpush1.msra.mxu0 0.0
    %1664 = vmatprep.subr.mxu0 0.0
    %1665 = vmatpush1.msra.mxu0 0.0
    %1666 = vmatprep.subr.mxu0 0.0
    %1667 = vmatpush1.msra.mxu0 0.0
    %1668 = vmatprep.subr.mxu0 0.0
    %1669 = vmatpush1.msra.mxu0 0.0
    %1670 = vmatprep.subr.mxu0 0.0
    %1671 = vmatpush1.msra.mxu0 0.0
    %1672 = vmatprep.subr.mxu0 0.0
    %1673 = vmatpush1.msra.mxu0 0.0
    %1674 = vmatprep.subr.mxu0 0.0
    %1675 = vmatpush1.msra.mxu0 0.0
    %1676 = vmatprep.subr.mxu0 0.0
    %1677 = vmatpush1.msra.mxu0 0.0
    %1678 = vmatprep.subr.mxu0 0.0
    %1679 = vmatpush1.msra.mxu0 0.0
    %1680 = vmatprep.subr.mxu0 0.0
    %1681 = vmatpush1.msra.mxu0 0.0
    %1682 = vmatprep.subr.mxu0 0.0
    %1683 = vmatpush1.msra.mxu0 0.0
    %1684 = vmatprep.subr.mxu0 0.0
    %1685 = vmatpush1.msra.mxu0 0.0
    %1686 = vmatprep.subr.mxu0 0.0
    %1687 = vmatpush1.msra.mxu0 0.0
    %1688 = vmatprep.subr.mxu0 0.0
    %1689 = vmatpush1.msra.mxu0 0.0
    %1690 = vmatprep.subr.mxu0 0.0
    %1691 = vmatpush1.msra.mxu0 0.0
    %1692 = vmatprep.subr.mxu0 0.0
    %1693 = vmatpush1.msra.mxu0 0.0
    %1694 = vmatprep.subr.mxu0 0.0
    %1695 = vmatpush1.msra.mxu0 0.0
    %1696 = vmatprep.subr.mxu0 0.0
    %1697 = vmatpush1.msra.mxu0 0.0
    %1698 = vmatprep.subr.mxu0 0.0
    %1699 = vmatpush1.msra.mxu0 0.0
    %1700 = vmatprep.mubr.f32.mxu0 0.0
    %1701 = vmatmul.mubr.f32.gmra.mrb[0].mxu0 %v1563
    %v1702 = vpop.f32.mrb[0].mxu0
    %v1703 = vadd.f32 0.0, %v1702
    %v1704 = vpop.f32.mrb[0].mxu0
    %v1705 = vadd.f32 0.0, %v1704
    %1706 = vdwg.mxu0
    %v1707 = vadd.f32 %v217, %v1632
    %v1708 = vadd.f32 %v219, %v1634
    %v1709 = vadd.f32 %v330, %v1703
    %v1710 = vadd.f32 %v332, %v1705
    %v1711 = vxor.u32 %v1707, 2147483648
    %v1712 = vmul.f32 %v1711, 1.442695
    %v1713 = vpow.pop %v1712
    %v1714 = vadd.f32 %v1713, 1.0
    %v1715 = vrcp.pop %v1714
    %v1716 = vmul.f32 1.0, %v1715
    %v1717 = vxor.u32 %v1708, 2147483648
    %v1718 = vmul.f32 %v1717, 1.442695
    %v1719 = vpow.pop %v1718
    %v1720 = vadd.f32 %v1719, 1.0
    %v1721 = vrcp.pop %v1720
    %v1722 = vmul.f32 1.0, %v1721
    %v1723 = vtanh.pop %v1709
    %v1724 = vxor.u32 %v1710, 2147483648
    %v1725 = vmul.f32 %v1724, 1.442695
    %v1726 = vpow.pop %v1725
    %v1727 = vadd.f32 %v1726, 1.0
    %v1728 = vrcp.pop %v1727
    %v1729 = vmul.f32 1.0, %v1728
    %v1730 = vmul.f32 %v1722, %v1559
    %v1731 = vmul.f32 %v1716, %v1723
    %v1732 = vadd.f32 %v1730, %v1731
    %v1733 = vtanh.pop %v1732
    %v1734 = vmul.f32 %v1729, %v1733
    %v1735 = vld [vmem:[%s4] sm:$0xff]
    %v1736 = vld [vmem:[%s4 + $0x8] sm:$0xff]
    %v1737 = vld [vmem:[%s4 + $0x10] sm:$0xff]
    %v1738 = vld [vmem:[%s4 + $0x18] sm:$0xff]
    %v1739 = vld [vmem:[%s5] sm:$0x1]
    %v1741 = vlaneseq
    %v1742 = vshrl.u32 %v1741, 7
    %v1743 = vsub.s32 0, %v1742
    %v1744 = vrot.slane %v1739, %v1743
    %v1747 = vsel %vm350, %v1734, 0
    %1749 = vmatprep.subr.mxu0 0.0
    %1750 = vmatpush1.msra.mxu0 %v1735
    %1751 = vmatprep.subr.mxu0 0.0
    %1752 = vmatpush1.msra.mxu0 %v1736
    %1753 = vmatprep.subr.mxu0 0.0
    %1754 = vmatpush1.msra.mxu0 %v1737
    %1755 = vmatprep.subr.mxu0 0.0
    %1756 = vmatpush1.msra.mxu0 %v1738
    %1757 = vmatprep.subr.mxu0 0.0
    %1758 = vmatpush1.msra.mxu0 0.0
    %1759 = vmatprep.subr.mxu0 0.0
    %1760 = vmatpush1.msra.mxu0 0.0
    %1761 = vmatprep.subr.mxu0 0.0
    %1762 = vmatpush1.msra.mxu0 0.0
    %1763 = vmatprep.subr.mxu0 0.0
    %1764 = vmatpush1.msra.mxu0 0.0
    %1765 = vmatprep.subr.mxu0 0.0
    %1766 = vmatpush1.msra.mxu0 0.0
    %1767 = vmatprep.subr.mxu0 0.0
    %1768 = vmatpush1.msra.mxu0 0.0
    %1769 = vmatprep.subr.mxu0 0.0
    %1770 = vmatpush1.msra.mxu0 0.0
    %1771 = vmatprep.subr.mxu0 0.0
    %1772 = vmatpush1.msra.mxu0 0.0
    %1773 = vmatprep.subr.mxu0 0.0
    %1774 = vmatpush1.msra.mxu0 0.0
    %1775 = vmatprep.subr.mxu0 0.0
    %1776 = vmatpush1.msra.mxu0 0.0
    %1777 = vmatprep.subr.mxu0 0.0
    %1778 = vmatpush1.msra.mxu0 0.0
    %1779 = vmatprep.subr.mxu0 0.0
    %1780 = vmatpush1.msra.mxu0 0.0
    %1781 = vmatprep.subr.mxu0 0.0
    %1782 = vmatpush1.msra.mxu0 0.0
    %1783 = vmatprep.subr.mxu0 0.0
    %1784 = vmatpush1.msra.mxu0 0.0
    %1785 = vmatprep.subr.mxu0 0.0
    %1786 = vmatpush1.msra.mxu0 0.0
    %1787 = vmatprep.subr.mxu0 0.0
    %1788 = vmatpush1.msra.mxu0 0.0
    %1789 = vmatprep.subr.mxu0 0.0
    %1790 = vmatpush1.msra.mxu0 0.0
    %1791 = vmatprep.subr.mxu0 0.0
    %1792 = vmatpush1.msra.mxu0 0.0
    %1793 = vmatprep.subr.mxu0 0.0
    %1794 = vmatpush1.msra.mxu0 0.0
    %1795 = vmatprep.subr.mxu0 0.0
    %1796 = vmatpush1.msra.mxu0 0.0
    %1797 = vmatprep.subr.mxu0 0.0
    %1798 = vmatpush1.msra.mxu0 0.0
    %1799 = vmatprep.subr.mxu0 0.0
    %1800 = vmatpush1.msra.mxu0 0.0
    %1801 = vmatprep.subr.mxu0 0.0
    %1802 = vmatpush1.msra.mxu0 0.0
    %1803 = vmatprep.subr.mxu0 0.0
    %1804 = vmatpush1.msra.mxu0 0.0
    %1805 = vmatprep.subr.mxu0 0.0
    %1806 = vmatpush1.msra.mxu0 0.0
    %1807 = vmatprep.subr.mxu0 0.0
    %1808 = vmatpush1.msra.mxu0 0.0
    %1809 = vmatprep.subr.mxu0 0.0
    %1810 = vmatpush1.msra.mxu0 0.0
    %1811 = vmatprep.subr.mxu0 0.0
    %1812 = vmatpush1.msra.mxu0 0.0
    %1813 = vmatprep.mubr.f32.mxu0 0.0
    %1814 = vmatmul.mubr.f32.gmra.mrb[0].mxu0 %v1747
    %v1815 = vpop.f32.mrb[0].mxu0
    %v1816 = vadd.f32 %v1744, %v1815
    %v1817 = vpop.f32.mrb[0].mxu0
    %1818 = vdwg.mxu0
    %vm1819 = vcmp.gt.f32.partialorder %v1816, 0.0
    %v1820 = vmul.f32 %v1816, 0.01
    %v1821 = vsel %vm1819, %v1816, %v1820
    %1822 = vst [vmem:[#allocation5] sm:$0x3] %v1821
    // Predicated region
    $region30: #{tpu_custom_call.1} parent=1 // pred_check
      _
    $region31: #{tpu_custom_call.1} parent=1 // pred_check_branch
      %1824 = sbr.rel (0) target = $region33
    $region32: #{tpu_custom_call.1} parent=1 // pred_region
      %s1826 = ssub.s32 32, 32
      %1827 = vsyncadd [#allocation4], %s1826
      %s1829 = sshll.u32 [#allocation5], 4
      %s1830 = int_to_ptr.vmem [resolvable:$true] %s1829
      %1832 = dma.vmem_to_hbm [thread:$0]  %s1830, 32, %s6, [#allocation4]
    $region33: #{tpu_custom_call.1} parent=1 // pred_fallthru
      _
    // Predicated region
    $region34: #{tpu_custom_call.1} parent=1 // pred_check
      _
    $region35: #{tpu_custom_call.1} parent=1 // pred_check_branch
      %1834 = sbr.rel (0) target = $region37
    $region36: #{tpu_custom_call.1} parent=1 // pred_region
      %1835 = dma.done [#allocation4], 32
    $region37: #{tpu_custom_call.1} parent=1 // pred_fallthru
      _
    %1836 = vsyncpa [#allocation3], 1
    %1837 = vsyncpa [#allocation4], 1

</llo_original>
